<compile_context>
chip_gen: v7x
topology: tpu7x:2x2x1
jax: 0.10.0
libtpu: 0.0.40
codegen_flags: <defaults>
</compile_context>

<pallas_src>
import math
import functools

import jax
import jax.numpy as jnp
from jax.experimental import pallas as pl
from jax.experimental.pallas import tpu as pltpu

LN_EPS = 1e-5  # PyTorch nn.LayerNorm default


# --------------------------------------------------------------------------
# in-kernel helpers
# --------------------------------------------------------------------------

def _layernorm(x, gamma, beta):
    # x: (M, D), gamma/beta: (1, D); biased variance like torch.nn.LayerNorm
    mean = jnp.mean(x, axis=-1, keepdims=True)
    var = jnp.mean((x - mean) ** 2, axis=-1, keepdims=True)
    return (x - mean) * jax.lax.rsqrt(var + LN_EPS) * gamma + beta


def _mm(a, b, dtype):
    # MXU matmul with f32 accumulation; `dtype` controls operand precision
    return jnp.dot(a.astype(dtype), b.astype(dtype),
                   preferred_element_type=jnp.float32)


def _encoder_layer(x, wqkv, vecs, w1, b1, w2, *,
                   nhead, batch_per_tile, seq_len, matmul_dtype):
    """One TransformerLayer plus the outer `src = src + layer(src)` residual.

    x    : (MB, D)  f32 hidden state, MB = batch_per_tile * seq_len
    wqkv : (D, 3D)  fused Q/K/V weight (matmul dtype, e.g. bf16)
    vecs : (8, D)   rows = [bq, bk, bv, g1, be1, b2, g2, be2]  (f32)
    w1   : (D, F)   b1: (1, F)   w2: (F, D)
    """
    MB, D = x.shape
    Bt, S = batch_per_tile, seq_len
    hd = D // nhead
    scale = 1.0 / math.sqrt(hd)

    # ---- fused QKV projection: one MXU push with N = 3D ----
    qkv = _mm(x, wqkv, matmul_dtype)                         # (MB, 3D) f32
    q = qkv[:, 0 * D:1 * D] + vecs[0:1, :]
    k = qkv[:, 1 * D:2 * D] + vecs[1:2, :]
    v = qkv[:, 2 * D:3 * D] + vecs[2:3, :]

    if nhead == 1:
        # fast path: contract last dims directly (q @ k^T), no transposes
        q3 = q.reshape(Bt, S, hd)
        k3 = k.reshape(Bt, S, hd)
        v3 = v.reshape(Bt, S, hd)
        scores = jax.lax.dot_general(
            q3.astype(matmul_dtype), k3.astype(matmul_dtype),
            (((2,), (2,)), ((0,), (0,))),
            preferred_element_type=jnp.float32) * scale                 # (Bt, S, S)
        scores = scores - jnp.max(scores, axis=-1, keepdims=True)
        e = jnp.exp(scores)
        probs = e * pl.reciprocal(jnp.sum(e, axis=-1, keepdims=True), approx=True)
        ctx = jax.lax.dot_general(
            probs.astype(matmul_dtype), v3.astype(matmul_dtype),
            (((2,), (1,)), ((0,), (0,))),
            preferred_element_type=jnp.float32)                         # (Bt, S, hd)
        ctx = ctx.reshape(MB, D)
    else:
        # heads as a second batch dim -> no q/k/v transposes, single merge at end
        q4 = q.reshape(Bt, S, nhead, hd)
        k4 = k.reshape(Bt, S, nhead, hd)
        v4 = v.reshape(Bt, S, nhead, hd)
        scores = jax.lax.dot_general(
            q4.astype(matmul_dtype), k4.astype(matmul_dtype),
            (((3,), (3,)), ((0, 2), (0, 2))),
            preferred_element_type=jnp.float32) * scale                 # (Bt, H, S, S)
        scores = scores - jnp.max(scores, axis=-1, keepdims=True)
        e = jnp.exp(scores)
        probs = e * pl.reciprocal(jnp.sum(e, axis=-1, keepdims=True), approx=True)
        ctx4 = jax.lax.dot_general(
            probs.astype(matmul_dtype), v4.astype(matmul_dtype),
            (((3,), (1,)), ((0, 1), (0, 2))),
            preferred_element_type=jnp.float32)                         # (Bt, H, S, hd)
        ctx = ctx4.transpose(0, 2, 1, 3).reshape(MB, D)

    # TODO(synk): optional additive attention_mask (module default None) is not wired in.
    # TODO(synk): for long S on v7x, switch the attention to KV-tiled (flash-style)
    #             accumulation so (Bt*H, S, S) scores never fully materialize in VMEM.
    # TODO(synk): if d_model is not a lane multiple (e.g. 32 here), zero-padding D to 128
    #             (with masked LayerNorm statistics) would give lane-dense stores / MXU fill.

    h1 = _layernorm(x + ctx, vecs[3:4, :], vecs[4:5, :])                # norm1(src + attn)
    ff = _mm(h1, w1, matmul_dtype) + b1
    ff = jnp.maximum(ff, 0.0)
    ff = _mm(ff, w2, matmul_dtype) + vecs[5:6, :]
    h2 = _layernorm(h1 + ff, vecs[6:7, :], vecs[7:8, :])                # norm2(src + ffn)
    return x + h2                                                        # encoder residual


# --------------------------------------------------------------------------
# kernels
# --------------------------------------------------------------------------

def _fused_kernel(x_ref, g0_ref, b0_ref, wqkv_ref, vecs_ref, w1_ref, b1_ref, w2_ref,
                  hid_ref, *, num_layers, nhead, batch_per_tile, seq_len, matmul_dtype):
    # All layer weights are VMEM-resident; layers are statically unrolled, so
    # there is no per-layer grid-step overhead and no weight re-DMA.
    h = _layernorm(x_ref[...], g0_ref[...], b0_ref[...])    # prologue LN(x + pos)
    for l in range(num_layers):
        h = _encoder_layer(h, wqkv_ref[l], vecs_ref[l], w1_ref[l], b1_ref[l], w2_ref[l],
                           nhead=nhead, batch_per_tile=batch_per_tile,
                           seq_len=seq_len, matmul_dtype=matmul_dtype)
    hid_ref[...] = h


def _stream_kernel(x_ref, g0_ref, b0_ref, wqkv_ref, vecs_ref, w1_ref, b1_ref, w2_ref,
                   hid_ref, *, nhead, batch_per_tile, seq_len, matmul_dtype):
    # grid = (m_tiles, L); hidden block is resident across the (arbitrary) l axis.
    @pl.when(pl.program_id(1) == 0)
    def _():
        hid_ref[...] = _layernorm(x_ref[...], g0_ref[...], b0_ref[...])

    hid_ref[...] = _encoder_layer(
        hid_ref[...], wqkv_ref[...], vecs_ref[...], w1_ref[...], b1_ref[...], w2_ref[...],
        nhead=nhead, batch_per_tile=batch_per_tile, seq_len=seq_len,
        matmul_dtype=matmul_dtype)


# --------------------------------------------------------------------------
# wrapper helpers
# --------------------------------------------------------------------------

def _default_vmem_limit_bytes():
    try:
        cap = int(pltpu.get_tpu_info().vmem_capacity_bytes)
        if cap > 0:
            # ~85% of physical: ~108 MiB on v5e/v6e, ~54 MiB on v7x
            return max(32 << 20, min(int(cap * 0.85), 112 << 20))
    except Exception:
        pass
    return 56 << 20          # safe on v5e / v6e / v7x


def _num_tensorcores():
    try:
        return max(1, int(getattr(jax.devices()[0], "num_cores", 1)))
    except Exception:
        return 1


def _pick_batch_tile(B, S, D, F, nhead, layer_w_bytes, vmem_budget):
    """Largest whole-batch-element tile with rows <= 1024 that fits the VMEM budget;
    on multi-core parts prefer a tile count that is a multiple of the core count."""
    def vmem_est(d):
        rows = d * S
        act = rows * (6 * D + 2 * F) * 4           # hidden + qkv/ctx/ffn temporaries (f32)
        att = 2 * d * nhead * S * S * 4            # scores + probs (f32)
        return act + att + 2 * layer_w_bytes       # + double-buffered layer weights

    cands = [d for d in range(1, B + 1)
             if B % d == 0 and ((d * S) % 8 == 0 or d == B)]
    ok = [d for d in cands if d * S <= 1024 and vmem_est(d) <= 0.6 * vmem_budget]
    if not ok:
        return min(cands)
    tile = max(ok)
    cores = _num_tensorcores()
    if cores > 1:
        multi = [d for d in ok if (B // d) >= cores and (B // d) % cores == 0]
        if multi:
            tile = max(multi)
    return tile


def prepare_params(params, *, weights_dtype=jnp.bfloat16):
    """ONE-TIME weight preparation (call once per model, reuse every forward):
    stacks per-layer weights, fuses QKV, packs the small per-layer vectors,
    and casts the big matmul weights to `weights_dtype` (f32 accumulation)."""
    layers = params["layers"]

    def stk(name):
        return jnp.stack([lp[name] for lp in layers], axis=0)

    wqkv = jnp.concatenate([stk("wq"), stk("wk"), stk("wv")], axis=-1)      # (L, D, 3D)
    vecs = jnp.concatenate(
        [stk(n) for n in ("bq", "bk", "bv", "g1", "be1", "b2", "g2", "be2")],
        axis=1)                                                             # (L, 8, D)
    return {
        "wqkv": wqkv.astype(weights_dtype),
        "vecs": vecs.astype(jnp.float32),
        "w1": stk("w1").astype(weights_dtype),                              # (L, D, F)
        "b1": stk("b1").astype(jnp.float32),                                # (L, 1, F)
        "w2": stk("w2").astype(weights_dtype),                              # (L, F, D)
        "norm_g": params["norm_g"].astype(jnp.float32),
        "norm_b": params["norm_b"].astype(jnp.float32),
        "pos_table": params["pos_table"].astype(jnp.float32),
        "wd": params["wd"].astype(jnp.float32),
        "bd": params["bd"].astype(jnp.float32),
    }


# --------------------------------------------------------------------------
# forward
# --------------------------------------------------------------------------

def transformer_forward(x, prep, *, nhead=1, batch_tile=None, mode=None,
                        matmul_dtype=None, vmem_limit_bytes=None):
    B, S, D = x.shape
    L, _, F3 = prep["wqkv"].shape
    F_dim = prep["w1"].shape[-1]
    assert F3 == 3 * D and D % nhead == 0

    if matmul_dtype is None:
        matmul_dtype = prep["wqkv"].dtype
    if vmem_limit_bytes is None:
        vmem_limit_bytes = _default_vmem_limit_bytes()

    w_itemsize = jnp.dtype(prep["wqkv"].dtype).itemsize
    layer_w_bytes = (3 * D * D + 2 * D * F_dim) * w_itemsize
    if batch_tile is None:
        batch_tile = _pick_batch_tile(B, S, D, F_dim, nhead, layer_w_bytes,
                                      vmem_limit_bytes)
    assert B % batch_tile == 0
    m_tiles = B // batch_tile
    MB = batch_tile * S
    M = B * S

    if mode is None:
        all_w_bytes = L * layer_w_bytes + L * (8 * D + F_dim) * 4
        mode = "fused" if all_w_bytes <= min(8 << 20, vmem_limit_bytes // 4) else "stream"

    # Glue: positional-embedding add (tiny elementwise), flatten (B, S, D) -> (M, D).
    x_in = (x + prep["pos_table"][:S][None, :, :]).astype(jnp.float32).reshape(M, D)

    if mode == "fused":
        act_spec = pl.BlockSpec((MB, D), lambda m: (m, 0))
        vec_spec = pl.BlockSpec((1, D), lambda m: (0, 0))

        def full(shape):
            n = len(shape)
            return pl.BlockSpec(shape, lambda m: (0,) * n)

        kernel = functools.partial(
            _fused_kernel, num_layers=L, nhead=nhead, batch_per_tile=batch_tile,
            seq_len=S, matmul_dtype=matmul_dtype)
        grid = (m_tiles,)
        semantics = ("parallel",)
        in_specs = [act_spec, vec_spec, vec_spec,
                    full((L, D, 3 * D)), full((L, 8, D)),
                    full((L, D, F_dim)), full((L, 1, F_dim)), full((L, F_dim, D))]
    else:
        act_spec = pl.BlockSpec((MB, D), lambda m, l: (m, 0))     # invariant across l
        vec_spec = pl.BlockSpec((1, D), lambda m, l: (0, 0))

        def lspec(shape):
            n = len(shape)
            return pl.BlockSpec((pl.Squeezed(),) + shape,
                                lambda m, l: (l,) + (0,) * n)

        kernel = functools.partial(
            _stream_kernel, nhead=nhead, batch_per_tile=batch_tile,
            seq_len=S, matmul_dtype=matmul_dtype)
        grid = (m_tiles, L)
        semantics = ("parallel", "arbitrary")
        in_specs = [act_spec, vec_spec, vec_spec,
                    lspec((D, 3 * D)), lspec((8, D)),
                    lspec((D, F_dim)), lspec((1, F_dim)), lspec((F_dim, D))]

    hidden_flat = pl.pallas_call(
        kernel,
        out_shape=jax.ShapeDtypeStruct((M, D), jnp.float32),
        grid=grid,
        in_specs=in_specs,
        out_specs=act_spec,
        compiler_params=pltpu.CompilerParams(
            dimension_semantics=semantics,
            vmem_limit_bytes=int(vmem_limit_bytes)),
    )(x_in, prep["norm_g"], prep["norm_b"], prep["wqkv"], prep["vecs"],
      prep["w1"], prep["b1"], prep["w2"])

    # Decoder Linear(D -> 1) stays in XLA: a lane-width-1 Pallas output would
    # force masked vst.msk partial stores, and the matmul is tiny.
    out_flat = hidden_flat @ prep["wd"] + prep["bd"]            # (M, 1)
    out = out_flat.reshape(B, S, 1)
    hidden = hidden_flat.reshape(B, S, D)
    return out[:, 0, :], out, hidden


# --------------------------------------------------------------------------
# deterministic parameter construction (PyTorch-like per-layer dicts)
# --------------------------------------------------------------------------

def init_params(key, d_model, num_layers, dim_feedforward, max_seq_length):
    ks = iter(jax.random.split(key, 8 + 16 * num_layers))

    def w(shape, scale=0.1):
        return (scale * jax.random.normal(next(ks), shape)).astype(jnp.float32)

    params = {
        "pos_table": w((max_seq_length, d_model)),
        "norm_g": jnp.ones((1, d_model), jnp.float32),
        "norm_b": jnp.zeros((1, d_model), jnp.float32),
        "wd": w((d_model, 1)),
        "bd": w((1, 1), 0.01),
        "layers": [],
    }
    for _ in range(num_layers):
        params["layers"].append({
            "wq": w((d_model, d_model)), "bq": w((1, d_model), 0.01),
            "wk": w((d_model, d_model)), "bk": w((1, d_model), 0.01),
            "wv": w((d_model, d_model)), "bv": w((1, d_model), 0.01),
            "g1": jnp.ones((1, d_model), jnp.float32),
            "be1": jnp.zeros((1, d_model), jnp.float32),
            "w1": w((d_model, dim_feedforward)), "b1": w((1, dim_feedforward), 0.01),
            "w2": w((dim_feedforward, d_model)), "b2": w((1, d_model), 0.01),
            "g2": jnp.ones((1, d_model), jnp.float32),
            "be2": jnp.zeros((1, d_model), jnp.float32),
        })
    return params


# --------------------------------------------------------------------------
# pure-JAX reference (sanity check); matmul_dtype mirrors the kernel's operand cast
# --------------------------------------------------------------------------

def reference_forward(x, params, *, nhead, matmul_dtype=jnp.float32):
    B, S, D = x.shape
    dt = matmul_dtype

    def ln(v, g, b):
        m = jnp.mean(v, axis=-1, keepdims=True)
        va = jnp.mean((v - m) ** 2, axis=-1, keepdims=True)
        return (v - m) / jnp.sqrt(va + LN_EPS) * g + b

    def mm(a, b):
        return jnp.dot(a.astype(dt), b.astype(dt), preferred_element_type=jnp.float32)

    h = ln(x + params["pos_table"][:S][None], params["norm_g"], params["norm_b"])
    hd = D // nhead
    for lp in params["layers"]:
        q = mm(h, lp["wq"]) + lp["bq"]
        k = mm(h, lp["wk"]) + lp["bk"]
        v = mm(h, lp["wv"]) + lp["bv"]
        qh = q.reshape(B, S, nhead, hd).transpose(0, 2, 1, 3)
        kh = k.reshape(B, S, nhead, hd).transpose(0, 2, 1, 3)
        vh = v.reshape(B, S, nhead, hd).transpose(0, 2, 1, 3)
        sc = jnp.einsum("bhqd,bhkd->bhqk", qh.astype(dt), kh.astype(dt),
                        preferred_element_type=jnp.float32) / math.sqrt(hd)
        pr = jax.nn.softmax(sc, axis=-1)
        ctx = jnp.einsum("bhqk,bhkd->bhqd", pr.astype(dt), vh.astype(dt),
                         preferred_element_type=jnp.float32)
        ctx = ctx.transpose(0, 2, 1, 3).reshape(B, S, D)
        s1 = ln(h + ctx, lp["g1"], lp["be1"])
        ff = mm(jnp.maximum(mm(s1, lp["w1"]) + lp["b1"], 0.0), lp["w2"]) + lp["b2"]
        s2 = ln(s1 + ff, lp["g2"], lp["be2"])
        h = h + s2
    out = h @ params["wd"] + params["bd"]
    return out[:, 0, :], out, h


if __name__ == "__main__":
    B, S, D = 2, 8, 32
    NHEAD, NUM_LAYERS, DFF, MAX_SEQ = 1, 2, 128, 64

    key = jax.random.PRNGKey(0)
    kx, kp = jax.random.split(key)
    x = jax.random.normal(kx, (B, S, D), dtype=jnp.float32)
    params = init_params(kp, D, NUM_LAYERS, DFF, MAX_SEQ)

    # One-time weight prep (no per-call stacking).
    prep_bf16 = prepare_params(params)                            # default: bf16 weights
    prep_f32 = prepare_params(params, weights_dtype=jnp.float32)  # for a tight numerics check

    # (1) f32 weights, fused-layer kernel: tight check vs. the pure-JAX reference.
    out0, out, hidden = transformer_forward(x, prep_f32, nhead=NHEAD, mode="fused")
    jax.block_until_ready((out0, out, hidden))
    r0, r_out, r_hid = reference_forward(x, params, nhead=NHEAD, matmul_dtype=jnp.float32)

    assert out0.shape == (B, 1) and out.shape == (B, S, 1) and hidden.shape == (B, S, D)
    # tolerance allows the approx (EUP) reciprocal in the softmax normalization
    assert jnp.allclose(hidden, r_hid, atol=2e-3, rtol=2e-3)
    assert jnp.allclose(out, r_out, atol=2e-3, rtol=2e-3)
    assert jnp.allclose(out0, r0, atol=2e-3, rtol=2e-3)

    # (2) default bf16 weights, layer-streaming kernel: check vs. a bf16-matched reference.
    out0b, outb, hiddenb = transformer_forward(x, prep_bf16, nhead=NHEAD, mode="stream")
    jax.block_until_ready((out0b, outb, hiddenb))
    rb0, rb_out, rb_hid = reference_forward(x, params, nhead=NHEAD, matmul_dtype=jnp.bfloat16)

    assert outb.shape == (B, S, 1) and hiddenb.shape == (B, S, D)
    # looser tolerance: bf16 operand rounding (shared with the reference) + approx reciprocal
    assert jnp.allclose(hiddenb, rb_hid, atol=3e-2, rtol=3e-2)
    assert jnp.allclose(outb, rb_out, atol=3e-2, rtol=3e-2)
    assert jnp.allclose(out0b, rb0, atol=3e-2, rtol=3e-2)

    print("KERNEL_OK")
</pallas_src>

<mosaic_0001>
module attributes {stable_mosaic.version = 11 : i64} {
  func.func @_fused_kernel(%arg0: i32, %arg1: memref<16x32xf32, #tpu.memory_space<vmem>>, %arg2: memref<1x32xf32, #tpu.memory_space<vmem>>, %arg3: memref<1x32xf32, #tpu.memory_space<vmem>>, %arg4: memref<2x32x96xf32, #tpu.memory_space<vmem>>, %arg5: memref<2x8x32xf32, #tpu.memory_space<vmem>>, %arg6: memref<2x32x128xf32, #tpu.memory_space<vmem>>, %arg7: memref<2x1x128xf32, #tpu.memory_space<vmem>>, %arg8: memref<2x128x32xf32, #tpu.memory_space<vmem>>, %arg9: memref<16x32xf32, #tpu.memory_space<vmem>>) attributes {dimension_semantics = [#tpu.dimension_semantics<parallel>], iteration_bounds = array<i64: 1>, scalar_prefetch = 0 : i64, scratch_operands = 0 : i64, tpu.core_type = #tpu.core_type<tc>, window_params = [{transform_indices = @transform_0, window_bounds = array<i64: 16, 32>}, {pipeline_mode = #tpu.pipeline_mode<synchronous>, transform_indices = @transform_1, window_bounds = array<i64: 1, 32>}, {pipeline_mode = #tpu.pipeline_mode<synchronous>, transform_indices = @transform_2, window_bounds = array<i64: 1, 32>}, {pipeline_mode = #tpu.pipeline_mode<synchronous>, transform_indices = @transform_3, window_bounds = array<i64: 2, 32, 96>}, {pipeline_mode = #tpu.pipeline_mode<synchronous>, transform_indices = @transform_4, window_bounds = array<i64: 2, 8, 32>}, {pipeline_mode = #tpu.pipeline_mode<synchronous>, transform_indices = @transform_5, window_bounds = array<i64: 2, 32, 128>}, {pipeline_mode = #tpu.pipeline_mode<synchronous>, transform_indices = @transform_6, window_bounds = array<i64: 2, 1, 128>}, {pipeline_mode = #tpu.pipeline_mode<synchronous>, transform_indices = @transform_7, window_bounds = array<i64: 2, 128, 32>}, {transform_indices = @transform_8, window_bounds = array<i64: 16, 32>}]} {
    %c0 = arith.constant 0 : index
    %c0_0 = arith.constant 0 : index
    %0 = vector.load %arg1[%c0, %c0_0] : memref<16x32xf32, #tpu.memory_space<vmem>>, vector<16x32xf32>
    %c0_1 = arith.constant 0 : index
    %c0_2 = arith.constant 0 : index
    %1 = vector.load %arg2[%c0_1, %c0_2] : memref<1x32xf32, #tpu.memory_space<vmem>>, vector<1x32xf32>
    %c0_3 = arith.constant 0 : index
    %c0_4 = arith.constant 0 : index
    %2 = vector.load %arg3[%c0_3, %c0_4] : memref<1x32xf32, #tpu.memory_space<vmem>>, vector<1x32xf32>
    %cst = arith.constant dense<0.000000e+00> : vector<16xf32>
    %3 = vector.multi_reduction <add>, %0, %cst [1] : vector<16x32xf32> to vector<16xf32>
    %4 = vector.shape_cast %3 : vector<16xf32> to vector<16x1xf32>
    %cst_5 = arith.constant 3.200000e+01 : f32
    %5 = vector.broadcast %cst_5 : f32 to vector<16x1xf32>
    %6 = arith.divf %4, %5 : vector<16x1xf32>
    %7 = vector.broadcast %6 : vector<16x1xf32> to vector<16x32xf32>
    %8 = arith.subf %0, %7 : vector<16x32xf32>
    %9 = arith.mulf %8, %8 : vector<16x32xf32>
    %cst_6 = arith.constant dense<0.000000e+00> : vector<16xf32>
    %10 = vector.multi_reduction <add>, %9, %cst_6 [1] : vector<16x32xf32> to vector<16xf32>
    %11 = vector.shape_cast %10 : vector<16xf32> to vector<16x1xf32>
    %cst_7 = arith.constant 3.200000e+01 : f32
    %12 = vector.broadcast %cst_7 : f32 to vector<16x1xf32>
    %13 = arith.divf %11, %12 : vector<16x1xf32>
    %14 = vector.broadcast %6 : vector<16x1xf32> to vector<16x32xf32>
    %15 = arith.subf %0, %14 : vector<16x32xf32>
    %cst_8 = arith.constant 9.99999974E-6 : f32
    %16 = vector.broadcast %cst_8 : f32 to vector<16x1xf32>
    %17 = arith.addf %13, %16 : vector<16x1xf32>
    %18 = math.rsqrt %17 : vector<16x1xf32>
    %19 = vector.broadcast %18 : vector<16x1xf32> to vector<16x32xf32>
    %20 = arith.mulf %15, %19 : vector<16x32xf32>
    %21 = vector.broadcast %1 : vector<1x32xf32> to vector<16x32xf32>
    %22 = arith.mulf %20, %21 : vector<16x32xf32>
    %23 = vector.broadcast %2 : vector<1x32xf32> to vector<16x32xf32>
    %24 = arith.addf %22, %23 : vector<16x32xf32>
    %c0_9 = arith.constant 0 : index
    %c0_10 = arith.constant 0 : index
    %c0_11 = arith.constant 0 : index
    %25 = vector.load %arg4[%c0_9, %c0_10, %c0_11] : memref<2x32x96xf32, #tpu.memory_space<vmem>>, vector<1x32x96xf32>
    %26 = vector.shape_cast %25 : vector<1x32x96xf32> to vector<32x96xf32>
    %c0_12 = arith.constant 0 : index
    %c0_13 = arith.constant 0 : index
    %c0_14 = arith.constant 0 : index
    %27 = vector.load %arg5[%c0_12, %c0_13, %c0_14] : memref<2x8x32xf32, #tpu.memory_space<vmem>>, vector<1x8x32xf32>
    %28 = vector.shape_cast %27 : vector<1x8x32xf32> to vector<8x32xf32>
    %c0_15 = arith.constant 0 : index
    %c0_16 = arith.constant 0 : index
    %c0_17 = arith.constant 0 : index
    %29 = vector.load %arg6[%c0_15, %c0_16, %c0_17] : memref<2x32x128xf32, #tpu.memory_space<vmem>>, vector<1x32x128xf32>
    %30 = vector.shape_cast %29 : vector<1x32x128xf32> to vector<32x128xf32>
    %c0_18 = arith.constant 0 : index
    %c0_19 = arith.constant 0 : index
    %c0_20 = arith.constant 0 : index
    %31 = vector.load %arg7[%c0_18, %c0_19, %c0_20] : memref<2x1x128xf32, #tpu.memory_space<vmem>>, vector<1x1x128xf32>
    %32 = vector.shape_cast %31 : vector<1x1x128xf32> to vector<1x128xf32>
    %c0_21 = arith.constant 0 : index
    %c0_22 = arith.constant 0 : index
    %c0_23 = arith.constant 0 : index
    %33 = vector.load %arg8[%c0_21, %c0_22, %c0_23] : memref<2x128x32xf32, #tpu.memory_space<vmem>>, vector<1x128x32xf32>
    %34 = vector.shape_cast %33 : vector<1x128x32xf32> to vector<128x32xf32>
    %cst_24 = arith.constant dense<0.000000e+00> : vector<16x96xf32>
    %35 = tpu.matmul %24, %26, %cst_24 {dimension_numbers = #tpu.dot_dimension_numbers<[1], [0], [0], [1], [0, 0, 1, 1], [], []>} : vector<16x32xf32>, vector<32x96xf32>, vector<16x96xf32> -> vector<16x96xf32>
    %36 = vector.extract_strided_slice %35 {offsets = [0, 0], sizes = [16, 32], strides = [1, 1]} : vector<16x96xf32> to vector<16x32xf32>
    %37 = vector.extract_strided_slice %28 {offsets = [0, 0], sizes = [1, 32], strides = [1, 1]} : vector<8x32xf32> to vector<1x32xf32>
    %38 = vector.broadcast %37 : vector<1x32xf32> to vector<16x32xf32>
    %39 = arith.addf %36, %38 : vector<16x32xf32>
    %40 = vector.extract_strided_slice %35 {offsets = [0, 32], sizes = [16, 32], strides = [1, 1]} : vector<16x96xf32> to vector<16x32xf32>
    %41 = vector.extract_strided_slice %28 {offsets = [1, 0], sizes = [1, 32], strides = [1, 1]} : vector<8x32xf32> to vector<1x32xf32>
    %42 = vector.broadcast %41 : vector<1x32xf32> to vector<16x32xf32>
    %43 = arith.addf %40, %42 : vector<16x32xf32>
    %44 = vector.extract_strided_slice %35 {offsets = [0, 64], sizes = [16, 32], strides = [1, 1]} : vector<16x96xf32> to vector<16x32xf32>
    %45 = vector.extract_strided_slice %28 {offsets = [2, 0], sizes = [1, 32], strides = [1, 1]} : vector<8x32xf32> to vector<1x32xf32>
    %46 = vector.broadcast %45 : vector<1x32xf32> to vector<16x32xf32>
    %47 = arith.addf %44, %46 : vector<16x32xf32>
    %48 = vector.shape_cast %39 : vector<16x32xf32> to vector<2x8x32xf32>
    %49 = vector.shape_cast %43 : vector<16x32xf32> to vector<2x8x32xf32>
    %50 = vector.shape_cast %47 : vector<16x32xf32> to vector<2x8x32xf32>
    %cst_25 = arith.constant dense<0.000000e+00> : vector<2x8x8xf32>
    %51 = tpu.matmul %48, %49, %cst_25 {dimension_numbers = #tpu.dot_dimension_numbers<[2], [2], [1], [1], [0, 0, 0, 1, 1, 1], [0], [0]>} : vector<2x8x32xf32>, vector<2x8x32xf32>, vector<2x8x8xf32> -> vector<2x8x8xf32>
    %cst_26 = arith.constant 0.176776692 : f32
    %52 = vector.broadcast %cst_26 : f32 to vector<2x8x8xf32>
    %53 = arith.mulf %51, %52 : vector<2x8x8xf32>
    %cst_27 = arith.constant dense<0xFF800000> : vector<2x8xf32>
    %54 = vector.multi_reduction <maximumf>, %53, %cst_27 [2] : vector<2x8x8xf32> to vector<2x8xf32>
    %55 = vector.shape_cast %54 : vector<2x8xf32> to vector<2x8x1xf32>
    %56 = vector.broadcast %55 : vector<2x8x1xf32> to vector<2x8x8xf32>
    %57 = arith.subf %53, %56 : vector<2x8x8xf32>
    %58 = math.exp %57 : vector<2x8x8xf32>
    %cst_28 = arith.constant dense<0.000000e+00> : vector<2x8xf32>
    %59 = vector.multi_reduction <add>, %58, %cst_28 [2] : vector<2x8x8xf32> to vector<2x8xf32>
    %60 = vector.shape_cast %59 : vector<2x8xf32> to vector<2x8x1xf32>
    %61 = tpu.reciprocal %60 {approx = true} : vector<2x8x1xf32> -> vector<2x8x1xf32>
    %62 = vector.broadcast %61 : vector<2x8x1xf32> to vector<2x8x8xf32>
    %63 = arith.mulf %58, %62 : vector<2x8x8xf32>
    %cst_29 = arith.constant dense<0.000000e+00> : vector<2x8x32xf32>
    %64 = tpu.matmul %63, %50, %cst_29 {dimension_numbers = #tpu.dot_dimension_numbers<[2], [1], [1], [2], [0, 0, 0, 1, 1, 2], [0], [0]>} : vector<2x8x8xf32>, vector<2x8x32xf32>, vector<2x8x32xf32> -> vector<2x8x32xf32>
    %65 = vector.shape_cast %64 : vector<2x8x32xf32> to vector<16x32xf32>
    %66 = arith.addf %24, %65 : vector<16x32xf32>
    %67 = vector.extract_strided_slice %28 {offsets = [3, 0], sizes = [1, 32], strides = [1, 1]} : vector<8x32xf32> to vector<1x32xf32>
    %68 = vector.extract_strided_slice %28 {offsets = [4, 0], sizes = [1, 32], strides = [1, 1]} : vector<8x32xf32> to vector<1x32xf32>
    %cst_30 = arith.constant dense<0.000000e+00> : vector<16xf32>
    %69 = vector.multi_reduction <add>, %66, %cst_30 [1] : vector<16x32xf32> to vector<16xf32>
    %70 = vector.shape_cast %69 : vector<16xf32> to vector<16x1xf32>
    %cst_31 = arith.constant 3.200000e+01 : f32
    %71 = vector.broadcast %cst_31 : f32 to vector<16x1xf32>
    %72 = arith.divf %70, %71 : vector<16x1xf32>
    %73 = vector.broadcast %72 : vector<16x1xf32> to vector<16x32xf32>
    %74 = arith.subf %66, %73 : vector<16x32xf32>
    %75 = arith.mulf %74, %74 : vector<16x32xf32>
    %cst_32 = arith.constant dense<0.000000e+00> : vector<16xf32>
    %76 = vector.multi_reduction <add>, %75, %cst_32 [1] : vector<16x32xf32> to vector<16xf32>
    %77 = vector.shape_cast %76 : vector<16xf32> to vector<16x1xf32>
    %cst_33 = arith.constant 3.200000e+01 : f32
    %78 = vector.broadcast %cst_33 : f32 to vector<16x1xf32>
    %79 = arith.divf %77, %78 : vector<16x1xf32>
    %80 = vector.broadcast %72 : vector<16x1xf32> to vector<16x32xf32>
    %81 = arith.subf %66, %80 : vector<16x32xf32>
    %cst_34 = arith.constant 9.99999974E-6 : f32
    %82 = vector.broadcast %cst_34 : f32 to vector<16x1xf32>
    %83 = arith.addf %79, %82 : vector<16x1xf32>
    %84 = math.rsqrt %83 : vector<16x1xf32>
    %85 = vector.broadcast %84 : vector<16x1xf32> to vector<16x32xf32>
    %86 = arith.mulf %81, %85 : vector<16x32xf32>
    %87 = vector.broadcast %67 : vector<1x32xf32> to vector<16x32xf32>
    %88 = arith.mulf %86, %87 : vector<16x32xf32>
    %89 = vector.broadcast %68 : vector<1x32xf32> to vector<16x32xf32>
    %90 = arith.addf %88, %89 : vector<16x32xf32>
    %cst_35 = arith.constant dense<0.000000e+00> : vector<16x128xf32>
    %91 = tpu.matmul %90, %30, %cst_35 {dimension_numbers = #tpu.dot_dimension_numbers<[1], [0], [0], [1], [0, 0, 1, 1], [], []>} : vector<16x32xf32>, vector<32x128xf32>, vector<16x128xf32> -> vector<16x128xf32>
    %92 = vector.broadcast %32 : vector<1x128xf32> to vector<16x128xf32>
    %93 = arith.addf %91, %92 : vector<16x128xf32>
    %cst_36 = arith.constant 0.000000e+00 : f32
    %94 = vector.broadcast %cst_36 : f32 to vector<16x128xf32>
    %95 = arith.maximumf %93, %94 : vector<16x128xf32>
    %cst_37 = arith.constant dense<0.000000e+00> : vector<16x32xf32>
    %96 = tpu.matmul %95, %34, %cst_37 {dimension_numbers = #tpu.dot_dimension_numbers<[1], [0], [0], [1], [0, 0, 1, 1], [], []>} : vector<16x128xf32>, vector<128x32xf32>, vector<16x32xf32> -> vector<16x32xf32>
    %97 = vector.extract_strided_slice %28 {offsets = [5, 0], sizes = [1, 32], strides = [1, 1]} : vector<8x32xf32> to vector<1x32xf32>
    %98 = vector.broadcast %97 : vector<1x32xf32> to vector<16x32xf32>
    %99 = arith.addf %96, %98 : vector<16x32xf32>
    %100 = arith.addf %90, %99 : vector<16x32xf32>
    %101 = vector.extract_strided_slice %28 {offsets = [6, 0], sizes = [1, 32], strides = [1, 1]} : vector<8x32xf32> to vector<1x32xf32>
    %102 = vector.extract_strided_slice %28 {offsets = [7, 0], sizes = [1, 32], strides = [1, 1]} : vector<8x32xf32> to vector<1x32xf32>
    %cst_38 = arith.constant dense<0.000000e+00> : vector<16xf32>
    %103 = vector.multi_reduction <add>, %100, %cst_38 [1] : vector<16x32xf32> to vector<16xf32>
    %104 = vector.shape_cast %103 : vector<16xf32> to vector<16x1xf32>
    %cst_39 = arith.constant 3.200000e+01 : f32
    %105 = vector.broadcast %cst_39 : f32 to vector<16x1xf32>
    %106 = arith.divf %104, %105 : vector<16x1xf32>
    %107 = vector.broadcast %106 : vector<16x1xf32> to vector<16x32xf32>
    %108 = arith.subf %100, %107 : vector<16x32xf32>
    %109 = arith.mulf %108, %108 : vector<16x32xf32>
    %cst_40 = arith.constant dense<0.000000e+00> : vector<16xf32>
    %110 = vector.multi_reduction <add>, %109, %cst_40 [1] : vector<16x32xf32> to vector<16xf32>
    %111 = vector.shape_cast %110 : vector<16xf32> to vector<16x1xf32>
    %cst_41 = arith.constant 3.200000e+01 : f32
    %112 = vector.broadcast %cst_41 : f32 to vector<16x1xf32>
    %113 = arith.divf %111, %112 : vector<16x1xf32>
    %114 = vector.broadcast %106 : vector<16x1xf32> to vector<16x32xf32>
    %115 = arith.subf %100, %114 : vector<16x32xf32>
    %cst_42 = arith.constant 9.99999974E-6 : f32
    %116 = vector.broadcast %cst_42 : f32 to vector<16x1xf32>
    %117 = arith.addf %113, %116 : vector<16x1xf32>
    %118 = math.rsqrt %117 : vector<16x1xf32>
    %119 = vector.broadcast %118 : vector<16x1xf32> to vector<16x32xf32>
    %120 = arith.mulf %115, %119 : vector<16x32xf32>
    %121 = vector.broadcast %101 : vector<1x32xf32> to vector<16x32xf32>
    %122 = arith.mulf %120, %121 : vector<16x32xf32>
    %123 = vector.broadcast %102 : vector<1x32xf32> to vector<16x32xf32>
    %124 = arith.addf %122, %123 : vector<16x32xf32>
    %125 = arith.addf %24, %124 : vector<16x32xf32>
    %c1 = arith.constant 1 : index
    %c0_43 = arith.constant 0 : index
    %c0_44 = arith.constant 0 : index
    %126 = vector.load %arg4[%c1, %c0_43, %c0_44] : memref<2x32x96xf32, #tpu.memory_space<vmem>>, vector<1x32x96xf32>
    %127 = vector.shape_cast %126 : vector<1x32x96xf32> to vector<32x96xf32>
    %c1_45 = arith.constant 1 : index
    %c0_46 = arith.constant 0 : index
    %c0_47 = arith.constant 0 : index
    %128 = vector.load %arg5[%c1_45, %c0_46, %c0_47] : memref<2x8x32xf32, #tpu.memory_space<vmem>>, vector<1x8x32xf32>
    %129 = vector.shape_cast %128 : vector<1x8x32xf32> to vector<8x32xf32>
    %c1_48 = arith.constant 1 : index
    %c0_49 = arith.constant 0 : index
    %c0_50 = arith.constant 0 : index
    %130 = vector.load %arg6[%c1_48, %c0_49, %c0_50] : memref<2x32x128xf32, #tpu.memory_space<vmem>>, vector<1x32x128xf32>
    %131 = vector.shape_cast %130 : vector<1x32x128xf32> to vector<32x128xf32>
    %c1_51 = arith.constant 1 : index
    %c0_52 = arith.constant 0 : index
    %c0_53 = arith.constant 0 : index
    %132 = vector.load %arg7[%c1_51, %c0_52, %c0_53] : memref<2x1x128xf32, #tpu.memory_space<vmem>>, vector<1x1x128xf32>
    %133 = vector.shape_cast %132 : vector<1x1x128xf32> to vector<1x128xf32>
    %c1_54 = arith.constant 1 : index
    %c0_55 = arith.constant 0 : index
    %c0_56 = arith.constant 0 : index
    %134 = vector.load %arg8[%c1_54, %c0_55, %c0_56] : memref<2x128x32xf32, #tpu.memory_space<vmem>>, vector<1x128x32xf32>
    %135 = vector.shape_cast %134 : vector<1x128x32xf32> to vector<128x32xf32>
    %cst_57 = arith.constant dense<0.000000e+00> : vector<16x96xf32>
    %136 = tpu.matmul %125, %127, %cst_57 {dimension_numbers = #tpu.dot_dimension_numbers<[1], [0], [0], [1], [0, 0, 1, 1], [], []>} : vector<16x32xf32>, vector<32x96xf32>, vector<16x96xf32> -> vector<16x96xf32>
    %137 = vector.extract_strided_slice %136 {offsets = [0, 0], sizes = [16, 32], strides = [1, 1]} : vector<16x96xf32> to vector<16x32xf32>
    %138 = vector.extract_strided_slice %129 {offsets = [0, 0], sizes = [1, 32], strides = [1, 1]} : vector<8x32xf32> to vector<1x32xf32>
    %139 = vector.broadcast %138 : vector<1x32xf32> to vector<16x32xf32>
    %140 = arith.addf %137, %139 : vector<16x32xf32>
    %141 = vector.extract_strided_slice %136 {offsets = [0, 32], sizes = [16, 32], strides = [1, 1]} : vector<16x96xf32> to vector<16x32xf32>
    %142 = vector.extract_strided_slice %129 {offsets = [1, 0], sizes = [1, 32], strides = [1, 1]} : vector<8x32xf32> to vector<1x32xf32>
    %143 = vector.broadcast %142 : vector<1x32xf32> to vector<16x32xf32>
    %144 = arith.addf %141, %143 : vector<16x32xf32>
    %145 = vector.extract_strided_slice %136 {offsets = [0, 64], sizes = [16, 32], strides = [1, 1]} : vector<16x96xf32> to vector<16x32xf32>
    %146 = vector.extract_strided_slice %129 {offsets = [2, 0], sizes = [1, 32], strides = [1, 1]} : vector<8x32xf32> to vector<1x32xf32>
    %147 = vector.broadcast %146 : vector<1x32xf32> to vector<16x32xf32>
    %148 = arith.addf %145, %147 : vector<16x32xf32>
    %149 = vector.shape_cast %140 : vector<16x32xf32> to vector<2x8x32xf32>
    %150 = vector.shape_cast %144 : vector<16x32xf32> to vector<2x8x32xf32>
    %151 = vector.shape_cast %148 : vector<16x32xf32> to vector<2x8x32xf32>
    %cst_58 = arith.constant dense<0.000000e+00> : vector<2x8x8xf32>
    %152 = tpu.matmul %149, %150, %cst_58 {dimension_numbers = #tpu.dot_dimension_numbers<[2], [2], [1], [1], [0, 0, 0, 1, 1, 1], [0], [0]>} : vector<2x8x32xf32>, vector<2x8x32xf32>, vector<2x8x8xf32> -> vector<2x8x8xf32>
    %cst_59 = arith.constant 0.176776692 : f32
    %153 = vector.broadcast %cst_59 : f32 to vector<2x8x8xf32>
    %154 = arith.mulf %152, %153 : vector<2x8x8xf32>
    %cst_60 = arith.constant dense<0xFF800000> : vector<2x8xf32>
    %155 = vector.multi_reduction <maximumf>, %154, %cst_60 [2] : vector<2x8x8xf32> to vector<2x8xf32>
    %156 = vector.shape_cast %155 : vector<2x8xf32> to vector<2x8x1xf32>
    %157 = vector.broadcast %156 : vector<2x8x1xf32> to vector<2x8x8xf32>
    %158 = arith.subf %154, %157 : vector<2x8x8xf32>
    %159 = math.exp %158 : vector<2x8x8xf32>
    %cst_61 = arith.constant dense<0.000000e+00> : vector<2x8xf32>
    %160 = vector.multi_reduction <add>, %159, %cst_61 [2] : vector<2x8x8xf32> to vector<2x8xf32>
    %161 = vector.shape_cast %160 : vector<2x8xf32> to vector<2x8x1xf32>
    %162 = tpu.reciprocal %161 {approx = true} : vector<2x8x1xf32> -> vector<2x8x1xf32>
    %163 = vector.broadcast %162 : vector<2x8x1xf32> to vector<2x8x8xf32>
    %164 = arith.mulf %159, %163 : vector<2x8x8xf32>
    %cst_62 = arith.constant dense<0.000000e+00> : vector<2x8x32xf32>
    %165 = tpu.matmul %164, %151, %cst_62 {dimension_numbers = #tpu.dot_dimension_numbers<[2], [1], [1], [2], [0, 0, 0, 1, 1, 2], [0], [0]>} : vector<2x8x8xf32>, vector<2x8x32xf32>, vector<2x8x32xf32> -> vector<2x8x32xf32>
    %166 = vector.shape_cast %165 : vector<2x8x32xf32> to vector<16x32xf32>
    %167 = arith.addf %125, %166 : vector<16x32xf32>
    %168 = vector.extract_strided_slice %129 {offsets = [3, 0], sizes = [1, 32], strides = [1, 1]} : vector<8x32xf32> to vector<1x32xf32>
    %169 = vector.extract_strided_slice %129 {offsets = [4, 0], sizes = [1, 32], strides = [1, 1]} : vector<8x32xf32> to vector<1x32xf32>
    %cst_63 = arith.constant dense<0.000000e+00> : vector<16xf32>
    %170 = vector.multi_reduction <add>, %167, %cst_63 [1] : vector<16x32xf32> to vector<16xf32>
    %171 = vector.shape_cast %170 : vector<16xf32> to vector<16x1xf32>
    %cst_64 = arith.constant 3.200000e+01 : f32
    %172 = vector.broadcast %cst_64 : f32 to vector<16x1xf32>
    %173 = arith.divf %171, %172 : vector<16x1xf32>
    %174 = vector.broadcast %173 : vector<16x1xf32> to vector<16x32xf32>
    %175 = arith.subf %167, %174 : vector<16x32xf32>
    %176 = arith.mulf %175, %175 : vector<16x32xf32>
    %cst_65 = arith.constant dense<0.000000e+00> : vector<16xf32>
    %177 = vector.multi_reduction <add>, %176, %cst_65 [1] : vector<16x32xf32> to vector<16xf32>
    %178 = vector.shape_cast %177 : vector<16xf32> to vector<16x1xf32>
    %cst_66 = arith.constant 3.200000e+01 : f32
    %179 = vector.broadcast %cst_66 : f32 to vector<16x1xf32>
    %180 = arith.divf %178, %179 : vector<16x1xf32>
    %181 = vector.broadcast %173 : vector<16x1xf32> to vector<16x32xf32>
    %182 = arith.subf %167, %181 : vector<16x32xf32>
    %cst_67 = arith.constant 9.99999974E-6 : f32
    %183 = vector.broadcast %cst_67 : f32 to vector<16x1xf32>
    %184 = arith.addf %180, %183 : vector<16x1xf32>
    %185 = math.rsqrt %184 : vector<16x1xf32>
    %186 = vector.broadcast %185 : vector<16x1xf32> to vector<16x32xf32>
    %187 = arith.mulf %182, %186 : vector<16x32xf32>
    %188 = vector.broadcast %168 : vector<1x32xf32> to vector<16x32xf32>
    %189 = arith.mulf %187, %188 : vector<16x32xf32>
    %190 = vector.broadcast %169 : vector<1x32xf32> to vector<16x32xf32>
    %191 = arith.addf %189, %190 : vector<16x32xf32>
    %cst_68 = arith.constant dense<0.000000e+00> : vector<16x128xf32>
    %192 = tpu.matmul %191, %131, %cst_68 {dimension_numbers = #tpu.dot_dimension_numbers<[1], [0], [0], [1], [0, 0, 1, 1], [], []>} : vector<16x32xf32>, vector<32x128xf32>, vector<16x128xf32> -> vector<16x128xf32>
    %193 = vector.broadcast %133 : vector<1x128xf32> to vector<16x128xf32>
    %194 = arith.addf %192, %193 : vector<16x128xf32>
    %cst_69 = arith.constant 0.000000e+00 : f32
    %195 = vector.broadcast %cst_69 : f32 to vector<16x128xf32>
    %196 = arith.maximumf %194, %195 : vector<16x128xf32>
    %cst_70 = arith.constant dense<0.000000e+00> : vector<16x32xf32>
    %197 = tpu.matmul %196, %135, %cst_70 {dimension_numbers = #tpu.dot_dimension_numbers<[1], [0], [0], [1], [0, 0, 1, 1], [], []>} : vector<16x128xf32>, vector<128x32xf32>, vector<16x32xf32> -> vector<16x32xf32>
    %198 = vector.extract_strided_slice %129 {offsets = [5, 0], sizes = [1, 32], strides = [1, 1]} : vector<8x32xf32> to vector<1x32xf32>
    %199 = vector.broadcast %198 : vector<1x32xf32> to vector<16x32xf32>
    %200 = arith.addf %197, %199 : vector<16x32xf32>
    %201 = arith.addf %191, %200 : vector<16x32xf32>
    %202 = vector.extract_strided_slice %129 {offsets = [6, 0], sizes = [1, 32], strides = [1, 1]} : vector<8x32xf32> to vector<1x32xf32>
    %203 = vector.extract_strided_slice %129 {offsets = [7, 0], sizes = [1, 32], strides = [1, 1]} : vector<8x32xf32> to vector<1x32xf32>
    %cst_71 = arith.constant dense<0.000000e+00> : vector<16xf32>
    %204 = vector.multi_reduction <add>, %201, %cst_71 [1] : vector<16x32xf32> to vector<16xf32>
    %205 = vector.shape_cast %204 : vector<16xf32> to vector<16x1xf32>
    %cst_72 = arith.constant 3.200000e+01 : f32
    %206 = vector.broadcast %cst_72 : f32 to vector<16x1xf32>
    %207 = arith.divf %205, %206 : vector<16x1xf32>
    %208 = vector.broadcast %207 : vector<16x1xf32> to vector<16x32xf32>
    %209 = arith.subf %201, %208 : vector<16x32xf32>
    %210 = arith.mulf %209, %209 : vector<16x32xf32>
    %cst_73 = arith.constant dense<0.000000e+00> : vector<16xf32>
    %211 = vector.multi_reduction <add>, %210, %cst_73 [1] : vector<16x32xf32> to vector<16xf32>
    %212 = vector.shape_cast %211 : vector<16xf32> to vector<16x1xf32>
    %cst_74 = arith.constant 3.200000e+01 : f32
    %213 = vector.broadcast %cst_74 : f32 to vector<16x1xf32>
    %214 = arith.divf %212, %213 : vector<16x1xf32>
    %215 = vector.broadcast %207 : vector<16x1xf32> to vector<16x32xf32>
    %216 = arith.subf %201, %215 : vector<16x32xf32>
    %cst_75 = arith.constant 9.99999974E-6 : f32
    %217 = vector.broadcast %cst_75 : f32 to vector<16x1xf32>
    %218 = arith.addf %214, %217 : vector<16x1xf32>
    %219 = math.rsqrt %218 : vector<16x1xf32>
    %220 = vector.broadcast %219 : vector<16x1xf32> to vector<16x32xf32>
    %221 = arith.mulf %216, %220 : vector<16x32xf32>
    %222 = vector.broadcast %202 : vector<1x32xf32> to vector<16x32xf32>
    %223 = arith.mulf %221, %222 : vector<16x32xf32>
    %224 = vector.broadcast %203 : vector<1x32xf32> to vector<16x32xf32>
    %225 = arith.addf %223, %224 : vector<16x32xf32>
    %226 = arith.addf %125, %225 : vector<16x32xf32>
    %c0_76 = arith.constant 0 : index
    %c0_77 = arith.constant 0 : index
    %227 = vector.load %arg9[%c0_76, %c0_77] : memref<16x32xf32, #tpu.memory_space<vmem>>, vector<16x32xf32>
    tpu.vector_store %arg9[%c0_76, %c0_77], %226 {strides = array<i32>} : memref<16x32xf32, #tpu.memory_space<vmem>>, vector<16x32xf32>,
    return
  }
  func.func @transform_0(%arg0: i32) -> (i32, i32) {
    %c0_i32 = arith.constant 0 : i32
    %c0_i32_0 = arith.constant 0 : i32
    return %arg0, %c0_i32 : i32, i32
  }
  func.func @transform_1(%arg0: i32) -> (i32, i32) {
    %c0_i32 = arith.constant 0 : i32
    %c0_i32_0 = arith.constant 0 : i32
    %c0_i32_1 = arith.constant 0 : i32
    return %c0_i32, %c0_i32_0 : i32, i32
  }
  func.func @transform_2(%arg0: i32) -> (i32, i32) {
    %c0_i32 = arith.constant 0 : i32
    %c0_i32_0 = arith.constant 0 : i32
    %c0_i32_1 = arith.constant 0 : i32
    return %c0_i32, %c0_i32_0 : i32, i32
  }
  func.func @transform_3(%arg0: i32) -> (i32, i32, i32) {
    %c0_i32 = arith.constant 0 : i32
    %c0_i32_0 = arith.constant 0 : i32
    %c0_i32_1 = arith.constant 0 : i32
    %c0_i32_2 = arith.constant 0 : i32
    return %c0_i32, %c0_i32_0, %c0_i32_1 : i32, i32, i32
  }
  func.func @transform_4(%arg0: i32) -> (i32, i32, i32) {
    %c0_i32 = arith.constant 0 : i32
    %c0_i32_0 = arith.constant 0 : i32
    %c0_i32_1 = arith.constant 0 : i32
    %c0_i32_2 = arith.constant 0 : i32
    return %c0_i32, %c0_i32_0, %c0_i32_1 : i32, i32, i32
  }
  func.func @transform_5(%arg0: i32) -> (i32, i32, i32) {
    %c0_i32 = arith.constant 0 : i32
    %c0_i32_0 = arith.constant 0 : i32
    %c0_i32_1 = arith.constant 0 : i32
    %c0_i32_2 = arith.constant 0 : i32
    return %c0_i32, %c0_i32_0, %c0_i32_1 : i32, i32, i32
  }
  func.func @transform_6(%arg0: i32) -> (i32, i32, i32) {
    %c0_i32 = arith.constant 0 : i32
    %c0_i32_0 = arith.constant 0 : i32
    %c0_i32_1 = arith.constant 0 : i32
    %c0_i32_2 = arith.constant 0 : i32
    return %c0_i32, %c0_i32_0, %c0_i32_1 : i32, i32, i32
  }
  func.func @transform_7(%arg0: i32) -> (i32, i32, i32) {
    %c0_i32 = arith.constant 0 : i32
    %c0_i32_0 = arith.constant 0 : i32
    %c0_i32_1 = arith.constant 0 : i32
    %c0_i32_2 = arith.constant 0 : i32
    return %c0_i32, %c0_i32_0, %c0_i32_1 : i32, i32, i32
  }
  func.func @transform_8(%arg0: i32) -> (i32, i32) {
    %c0_i32 = arith.constant 0 : i32
    %c0_i32_0 = arith.constant 0 : i32
    return %arg0, %c0_i32 : i32, i32
  }
}

</mosaic_0001>

<llo_original>
// kernel: tpu_custom_call.1
$region0: #{tpu_custom_call.1}
  #allocation0 [shape = 'u32[]', space=smem, size = 0x4, offset = 0x4, fixed_abs, tag = 'smem constant byte address 0x4 - core index']
  #allocation1 [shape = 'u32[144,128]{1,0:T(1,128)}', space=vmem, size = 0x12000, scoped, tag = 'internal scratch']
  %s0 = inlined_call_operand.vmem [shape: f32[16,32], index: 0, kind: input, shape index: {}]
  %s1 = inlined_call_operand.vmem [shape: f32[1,32], index: 1, kind: input, shape index: {}]
  %s2 = inlined_call_operand.vmem [shape: f32[1,32], index: 2, kind: input, shape index: {}]
  %s3 = inlined_call_operand.vmem [shape: f32[2,32,96], index: 3, kind: input, shape index: {}]
  %s4 = inlined_call_operand.vmem [shape: f32[2,8,32], index: 4, kind: input, shape index: {}]
  %s5 = inlined_call_operand.vmem [shape: f32[2,32,128], index: 5, kind: input, shape index: {}]
  %s6 = inlined_call_operand.vmem [shape: f32[2,1,128], index: 6, kind: input, shape index: {}]
  %s7 = inlined_call_operand.vmem [shape: f32[2,128,32], index: 7, kind: input, shape index: {}]
  %s8 = inlined_call_operand.hbm [shape: f32[16,32], index: 8, kind: output, shape index: {}]
  %s9 = sld [smem:[#allocation0]]
  $region42: #{tpu_custom_call.1} parent=0
    _
  %s11 = ssub.s32 1, %s9
  %s12 = scalar_select 0, %s11, %s9
  $region1: #{tpu_custom_call.1} parent=0
    #allocation2 [shape = 'u8[8192]{0}', space=vmem, size = 0x2000, scoped, tag = 'output window, operand 0, single buffered']
    #allocation3 [shape = 's32[1]{0}', space=sflag, size = 0x4, scoped, tag = 'scoped memory for tpu_custom_call.1']
    %13 = vsyncpa [#allocation3], 0
    // Predicated region
    $region2: #{tpu_custom_call.1} parent=1 // pred_check
      _
    $region3: #{tpu_custom_call.1} parent=1 // pred_check_branch
      %15 = sbr.rel (0) target = $region5
    $region4: #{tpu_custom_call.1} parent=1 // pred_region
      _
    $region5: #{tpu_custom_call.1} parent=1 // pred_fallthru
      _
    // Predicated region
    $region6: #{tpu_custom_call.1} parent=1 // pred_check
      _
    $region7: #{tpu_custom_call.1} parent=1 // pred_check_branch
      %17 = sbr.rel (0) target = $region9
    $region8: #{tpu_custom_call.1} parent=1 // pred_region
      _
    $region9: #{tpu_custom_call.1} parent=1 // pred_fallthru
      _
    // Predicated region
    $region10: #{tpu_custom_call.1} parent=1 // pred_check
      _
    $region11: #{tpu_custom_call.1} parent=1 // pred_check_branch
      %19 = sbr.rel (0) target = $region13
    $region12: #{tpu_custom_call.1} parent=1 // pred_region
      _
    $region13: #{tpu_custom_call.1} parent=1 // pred_fallthru
      _
    // Predicated region
    $region14: #{tpu_custom_call.1} parent=1 // pred_check
      _
    $region15: #{tpu_custom_call.1} parent=1 // pred_check_branch
      %21 = sbr.rel (0) target = $region17
    $region16: #{tpu_custom_call.1} parent=1 // pred_region
      _
    $region17: #{tpu_custom_call.1} parent=1 // pred_fallthru
      _
    // Predicated region
    $region18: #{tpu_custom_call.1} parent=1 // pred_check
      _
    $region19: #{tpu_custom_call.1} parent=1 // pred_check_branch
      %23 = sbr.rel (0) target = $region21
    $region20: #{tpu_custom_call.1} parent=1 // pred_region
      _
    $region21: #{tpu_custom_call.1} parent=1 // pred_fallthru
      _
    // Predicated region
    $region22: #{tpu_custom_call.1} parent=1 // pred_check
      _
    $region23: #{tpu_custom_call.1} parent=1 // pred_check_branch
      %25 = sbr.rel (0) target = $region25
    $region24: #{tpu_custom_call.1} parent=1 // pred_region
      _
    $region25: #{tpu_custom_call.1} parent=1 // pred_fallthru
      _
    // Predicated region
    $region26: #{tpu_custom_call.1} parent=1 // pred_check
      _
    $region27: #{tpu_custom_call.1} parent=1 // pred_check_branch
      %27 = sbr.rel (0) target = $region29
    $region28: #{tpu_custom_call.1} parent=1 // pred_region
      _
    $region29: #{tpu_custom_call.1} parent=1 // pred_fallthru
      _
    // Predicated region
    $region30: #{tpu_custom_call.1} parent=1 // pred_check
      _
    $region31: #{tpu_custom_call.1} parent=1 // pred_check_branch
      %29 = sbr.rel (0) target = $region33
    $region32: #{tpu_custom_call.1} parent=1 // pred_region
      _
    $region33: #{tpu_custom_call.1} parent=1 // pred_fallthru
      _
    %v30 = vld [vmem:[%s0] sm:$0xff]
    %v31 = vld [vmem:[%s0 + $0x8] sm:$0xff]
    %v32 = vld [vmem:[%s1] sm:$0x1]
    %v33 = vld [vmem:[%s2] sm:$0x1]
    %vm34 = vcmask 261120
    %v35 = vsel %vm34, %v30, 0.0
    %36 = vadd.xlane.f32.xlu0 %v35
    %v37 = vpop.xlane.xlu0 %36
    %v38 = vsel %vm34, %v31, 0.0
    %39 = vadd.xlane.f32.xlu0 %v38
    %v40 = vpop.xlane.xlu0 %39
    %v41 = vrcp.pop 32.0
    %v42 = vmul.f32 %v37, %v41
    %v43 = vmul.f32 %v40, %v41
    %v44 = vsub.f32 %v30, %v42
    %v45 = vsub.f32 %v31, %v43
    %v46 = vmul.f32 %v44, %v44
    %v47 = vmul.f32 %v45, %v45
    %v48 = vsel %vm34, %v46, 0.0
    %49 = vadd.xlane.f32.xlu0 %v48
    %v50 = vpop.xlane.xlu0 %49
    %v51 = vsel %vm34, %v47, 0.0
    %52 = vadd.xlane.f32.xlu0 %v51
    %v53 = vpop.xlane.xlu0 %52
    %v54 = vmul.f32 %v50, %v41
    %v55 = vmul.f32 %v53, %v41
    %v56 = vadd.f32 %v54, 1e-05
    %v57 = vadd.f32 %v55, 1e-05
    %v58 = vrsqrt.pop %v56
    %v59 = vrsqrt.pop %v57
    %v60 = vmul.f32 %v44, %v58
    %v61 = vmul.f32 %v45, %v59
    %v63 = vlaneseq
    %v64 = vshrl.u32 %v63, 7
    %v65 = vsub.s32 0, %v64
    %v66 = vrot.slane %v32, %v65
    %v68 = vmul.f32 %v60, %v66
    %v69 = vmul.f32 %v61, %v66
    %v71 = vlaneseq
    %v72 = vshrl.u32 %v71, 7
    %v73 = vsub.s32 0, %v72
    %v74 = vrot.slane %v33, %v73
    %v76 = vadd.f32 %v68, %v74
    %v77 = vadd.f32 %v69, %v74
    %v78 = vld [vmem:[%s3] sm:$0xff]
    %v79 = vld [vmem:[%s3 + $0x8] sm:$0xff]
    %v80 = vld [vmem:[%s3 + $0x10] sm:$0xff]
    %v81 = vld [vmem:[%s3 + $0x18] sm:$0xff]
    %v82 = vld [vmem:[%s4] sm:$0xff]
    %v83 = vld [vmem:[%s5] sm:$0xff]
    %v84 = vld [vmem:[%s5 + $0x8] sm:$0xff]
    %v85 = vld [vmem:[%s5 + $0x10] sm:$0xff]
    %v86 = vld [vmem:[%s5 + $0x18] sm:$0xff]
    %v87 = vld [vmem:[%s6] sm:$0x1]
    %v88 = vld [vmem:[%s7] sm:$0xff]
    %v89 = vld [vmem:[%s7 + $0x8] sm:$0xff]
    %v90 = vld [vmem:[%s7 + $0x10] sm:$0xff]
    %v91 = vld [vmem:[%s7 + $0x18] sm:$0xff]
    %v92 = vld [vmem:[%s7 + $0x20] sm:$0xff]
    %v93 = vld [vmem:[%s7 + $0x28] sm:$0xff]
    %v94 = vld [vmem:[%s7 + $0x30] sm:$0xff]
    %v95 = vld [vmem:[%s7 + $0x38] sm:$0xff]
    %v96 = vld [vmem:[%s7 + $0x40] sm:$0xff]
    %v97 = vld [vmem:[%s7 + $0x48] sm:$0xff]
    %v98 = vld [vmem:[%s7 + $0x50] sm:$0xff]
    %v99 = vld [vmem:[%s7 + $0x58] sm:$0xff]
    %v100 = vld [vmem:[%s7 + $0x60] sm:$0xff]
    %v101 = vld [vmem:[%s7 + $0x68] sm:$0xff]
    %v102 = vld [vmem:[%s7 + $0x70] sm:$0xff]
    %v103 = vld [vmem:[%s7 + $0x78] sm:$0xff]
    %v105 = vsel %vm34, %v76, 0
    %v108 = vsel %vm34, %v77, 0
    %110 = vmatprep.subr.mxu0 0.0
    %111 = vmatpush1.msra.mxu0 %v78
    %112 = vmatprep.subr.mxu0 0.0
    %113 = vmatpush1.msra.mxu0 %v79
    %114 = vmatprep.subr.mxu0 0.0
    %115 = vmatpush1.msra.mxu0 %v80
    %116 = vmatprep.subr.mxu0 0.0
    %117 = vmatpush1.msra.mxu0 %v81
    %118 = vmatprep.subr.mxu0 0.0
    %119 = vmatpush1.msra.mxu0 0.0
    %120 = vmatprep.subr.mxu0 0.0
    %121 = vmatpush1.msra.mxu0 0.0
    %122 = vmatprep.subr.mxu0 0.0
    %123 = vmatpush1.msra.mxu0 0.0
    %124 = vmatprep.subr.mxu0 0.0
    %125 = vmatpush1.msra.mxu0 0.0
    %126 = vmatprep.subr.mxu0 0.0
    %127 = vmatpush1.msra.mxu0 0.0
    %128 = vmatprep.subr.mxu0 0.0
    %129 = vmatpush1.msra.mxu0 0.0
    %130 = vmatprep.subr.mxu0 0.0
    %131 = vmatpush1.msra.mxu0 0.0
    %132 = vmatprep.subr.mxu0 0.0
    %133 = vmatpush1.msra.mxu0 0.0
    %134 = vmatprep.subr.mxu0 0.0
    %135 = vmatpush1.msra.mxu0 0.0
    %136 = vmatprep.subr.mxu0 0.0
    %137 = vmatpush1.msra.mxu0 0.0
    %138 = vmatprep.subr.mxu0 0.0
    %139 = vmatpush1.msra.mxu0 0.0
    %140 = vmatprep.subr.mxu0 0.0
    %141 = vmatpush1.msra.mxu0 0.0
    %142 = vmatprep.subr.mxu0 0.0
    %143 = vmatpush1.msra.mxu0 0.0
    %144 = vmatprep.subr.mxu0 0.0
    %145 = vmatpush1.msra.mxu0 0.0
    %146 = vmatprep.subr.mxu0 0.0
    %147 = vmatpush1.msra.mxu0 0.0
    %148 = vmatprep.subr.mxu0 0.0
    %149 = vmatpush1.msra.mxu0 0.0
    %150 = vmatprep.subr.mxu0 0.0
    %151 = vmatpush1.msra.mxu0 0.0
    %152 = vmatprep.subr.mxu0 0.0
    %153 = vmatpush1.msra.mxu0 0.0
    %154 = vmatprep.subr.mxu0 0.0
    %155 = vmatpush1.msra.mxu0 0.0
    %156 = vmatprep.subr.mxu0 0.0
    %157 = vmatpush1.msra.mxu0 0.0
    %158 = vmatprep.subr.mxu0 0.0
    %159 = vmatpush1.msra.mxu0 0.0
    %160 = vmatprep.subr.mxu0 0.0
    %161 = vmatpush1.msra.mxu0 0.0
    %162 = vmatprep.subr.mxu0 0.0
    %163 = vmatpush1.msra.mxu0 0.0
    %164 = vmatprep.subr.mxu0 0.0
    %165 = vmatpush1.msra.mxu0 0.0
    %166 = vmatprep.subr.mxu0 0.0
    %167 = vmatpush1.msra.mxu0 0.0
    %168 = vmatprep.subr.mxu0 0.0
    %169 = vmatpush1.msra.mxu0 0.0
    %170 = vmatprep.subr.mxu0 0.0
    %171 = vmatpush1.msra.mxu0 0.0
    %172 = vmatprep.subr.mxu0 0.0
    %173 = vmatpush1.msra.mxu0 0.0
    %174 = vmatprep.mubr.f32.mxu0 0.0
    %175 = vmatmul.mubr.f32.gmra.mrb[0].mxu0 %v105
    %v176 = vpop.f32.mrb[0].mxu0
    %v177 = vadd.f32 0.0, %v176
    %v178 = vpop.f32.mrb[0].mxu0
    %179 = vmatprep.mubr.f32.mxu0 0.0
    %180 = vmatmul.mubr.f32.gmra.mrb[0].mxu0 %v108
    %v181 = vpop.f32.mrb[0].mxu0
    %v182 = vadd.f32 0.0, %v181
    %v183 = vpop.f32.mrb[0].mxu0
    %184 = vdwg.mxu0
    %v185 = vlaneseq
    %v186 = vshrl.u32 %v185, 7
    %v187 = vsub.s32 0, %v186
    %v188 = vrot.slane %v82, %v187
    %v189 = vadd.f32 %v177, %v188
    %v190 = vadd.f32 %v182, %v188
    %v191 = vlaneseq
    %v192 = vshrl.u32 %v191, 7
    %v193 = vsub.s32 1, %v192
    %v194 = vrot.slane %v82, %v193
    %196 = vrot.lane.b32.xlu0 %v194, 32
    %v197 = vpop.permute.xlu0 %196
    %v199 = vadd.f32 %v177, %v197
    %v200 = vadd.f32 %v182, %v197
    %v201 = vlaneseq
    %v202 = vshrl.u32 %v201, 7
    %v203 = vsub.s32 2, %v202
    %v204 = vrot.slane %v82, %v203
    %206 = vrot.lane.b32.xlu0 %v204, 64
    %v207 = vpop.permute.xlu0 %206
    %v209 = vadd.f32 %v177, %v207
    %v210 = vadd.f32 %v182, %v207
    %212 = vrot.lane.b32.xlu0 %v199, 96
    %v213 = vpop.permute.xlu0 %212
    %v215 = vsel %vm34, %v189, 0
    %v217 = vsel %vm34, %v213, 0
    %219 = vmatprep.subr.mxu0 0.0
    %220 = vmatpush1.xpose.msra.mxu0 %v217
    %221 = vmatprep.subr.mxu0 0.0
    %222 = vmatpush1.xpose.msra.mxu0 0.0
    %223 = vmatprep.subr.mxu0 0.0
    %224 = vmatpush1.xpose.msra.mxu0 0.0
    %225 = vmatprep.subr.mxu0 0.0
    %226 = vmatpush1.xpose.msra.mxu0 0.0
    %227 = vmatprep.subr.mxu0 0.0
    %228 = vmatpush1.xpose.msra.mxu0 0.0
    %229 = vmatprep.subr.mxu0 0.0
    %230 = vmatpush1.xpose.msra.mxu0 0.0
    %231 = vmatprep.subr.mxu0 0.0
    %232 = vmatpush1.xpose.msra.mxu0 0.0
    %233 = vmatprep.subr.mxu0 0.0
    %234 = vmatpush1.xpose.msra.mxu0 0.0
    %235 = vmatprep.subr.mxu0 0.0
    %236 = vmatpush1.xpose.msra.mxu0 0.0
    %237 = vmatprep.subr.mxu0 0.0
    %238 = vmatpush1.xpose.msra.mxu0 0.0
    %239 = vmatprep.subr.mxu0 0.0
    %240 = vmatpush1.xpose.msra.mxu0 0.0
    %241 = vmatprep.subr.mxu0 0.0
    %242 = vmatpush1.xpose.msra.mxu0 0.0
    %243 = vmatprep.subr.mxu0 0.0
    %244 = vmatpush1.xpose.msra.mxu0 0.0
    %245 = vmatprep.subr.mxu0 0.0
    %246 = vmatpush1.xpose.msra.mxu0 0.0
    %247 = vmatprep.subr.mxu0 0.0
    %248 = vmatpush1.xpose.msra.mxu0 0.0
    %249 = vmatprep.subr.mxu0 0.0
    %250 = vmatpush1.xpose.msra.mxu0 0.0
    %251 = vmatprep.subr.mxu0 0.0
    %252 = vmatpush1.xpose.msra.mxu0 0.0
    %253 = vmatprep.subr.mxu0 0.0
    %254 = vmatpush1.xpose.msra.mxu0 0.0
    %255 = vmatprep.subr.mxu0 0.0
    %256 = vmatpush1.xpose.msra.mxu0 0.0
    %257 = vmatprep.subr.mxu0 0.0
    %258 = vmatpush1.xpose.msra.mxu0 0.0
    %259 = vmatprep.subr.mxu0 0.0
    %260 = vmatpush1.xpose.msra.mxu0 0.0
    %261 = vmatprep.subr.mxu0 0.0
    %262 = vmatpush1.xpose.msra.mxu0 0.0
    %263 = vmatprep.subr.mxu0 0.0
    %264 = vmatpush1.xpose.msra.mxu0 0.0
    %265 = vmatprep.subr.mxu0 0.0
    %266 = vmatpush1.xpose.msra.mxu0 0.0
    %267 = vmatprep.subr.mxu0 0.0
    %268 = vmatpush1.xpose.msra.mxu0 0.0
    %269 = vmatprep.subr.mxu0 0.0
    %270 = vmatpush1.xpose.msra.mxu0 0.0
    %271 = vmatprep.subr.mxu0 0.0
    %272 = vmatpush1.xpose.msra.mxu0 0.0
    %273 = vmatprep.subr.mxu0 0.0
    %274 = vmatpush1.xpose.msra.mxu0 0.0
    %275 = vmatprep.subr.mxu0 0.0
    %276 = vmatpush1.xpose.msra.mxu0 0.0
    %277 = vmatprep.subr.mxu0 0.0
    %278 = vmatpush1.xpose.msra.mxu0 0.0
    %279 = vmatprep.subr.mxu0 0.0
    %280 = vmatpush1.xpose.msra.mxu0 0.0
    %281 = vmatprep.subr.mxu0 0.0
    %282 = vmatpush1.xpose.msra.mxu0 0.0
    %283 = vmatprep.mubr.f32.mxu0 0.0
    %284 = vmatmul.mubr.f32.gmra.mrb[0].mxu0 %v215
    %v285 = vpop.f32.mrb[0].mxu0
    %v286 = vadd.f32 0.0, %v285
    %v287 = vpop.f32.mrb[0].mxu0
    %288 = vdwg.mxu0
    %290 = vrot.lane.b32.xlu0 %v200, 96
    %v291 = vpop.permute.xlu0 %290
    %v293 = vsel %vm34, %v190, 0
    %v295 = vsel %vm34, %v291, 0
    %297 = vmatprep.subr.mxu0 0.0
    %298 = vmatpush1.xpose.msra.mxu0 %v295
    %299 = vmatprep.subr.mxu0 0.0
    %300 = vmatpush1.xpose.msra.mxu0 0.0
    %301 = vmatprep.subr.mxu0 0.0
    %302 = vmatpush1.xpose.msra.mxu0 0.0
    %303 = vmatprep.subr.mxu0 0.0
    %304 = vmatpush1.xpose.msra.mxu0 0.0
    %305 = vmatprep.subr.mxu0 0.0
    %306 = vmatpush1.xpose.msra.mxu0 0.0
    %307 = vmatprep.subr.mxu0 0.0
    %308 = vmatpush1.xpose.msra.mxu0 0.0
    %309 = vmatprep.subr.mxu0 0.0
    %310 = vmatpush1.xpose.msra.mxu0 0.0
    %311 = vmatprep.subr.mxu0 0.0
    %312 = vmatpush1.xpose.msra.mxu0 0.0
    %313 = vmatprep.subr.mxu0 0.0
    %314 = vmatpush1.xpose.msra.mxu0 0.0
    %315 = vmatprep.subr.mxu0 0.0
    %316 = vmatpush1.xpose.msra.mxu0 0.0
    %317 = vmatprep.subr.mxu0 0.0
    %318 = vmatpush1.xpose.msra.mxu0 0.0
    %319 = vmatprep.subr.mxu0 0.0
    %320 = vmatpush1.xpose.msra.mxu0 0.0
    %321 = vmatprep.subr.mxu0 0.0
    %322 = vmatpush1.xpose.msra.mxu0 0.0
    %323 = vmatprep.subr.mxu0 0.0
    %324 = vmatpush1.xpose.msra.mxu0 0.0
    %325 = vmatprep.subr.mxu0 0.0
    %326 = vmatpush1.xpose.msra.mxu0 0.0
    %327 = vmatprep.subr.mxu0 0.0
    %328 = vmatpush1.xpose.msra.mxu0 0.0
    %329 = vmatprep.subr.mxu0 0.0
    %330 = vmatpush1.xpose.msra.mxu0 0.0
    %331 = vmatprep.subr.mxu0 0.0
    %332 = vmatpush1.xpose.msra.mxu0 0.0
    %333 = vmatprep.subr.mxu0 0.0
    %334 = vmatpush1.xpose.msra.mxu0 0.0
    %335 = vmatprep.subr.mxu0 0.0
    %336 = vmatpush1.xpose.msra.mxu0 0.0
    %337 = vmatprep.subr.mxu0 0.0
    %338 = vmatpush1.xpose.msra.mxu0 0.0
    %339 = vmatprep.subr.mxu0 0.0
    %340 = vmatpush1.xpose.msra.mxu0 0.0
    %341 = vmatprep.subr.mxu0 0.0
    %342 = vmatpush1.xpose.msra.mxu0 0.0
    %343 = vmatprep.subr.mxu0 0.0
    %344 = vmatpush1.xpose.msra.mxu0 0.0
    %345 = vmatprep.subr.mxu0 0.0
    %346 = vmatpush1.xpose.msra.mxu0 0.0
    %347 = vmatprep.subr.mxu0 0.0
    %348 = vmatpush1.xpose.msra.mxu0 0.0
    %349 = vmatprep.subr.mxu0 0.0
    %350 = vmatpush1.xpose.msra.mxu0 0.0
    %351 = vmatprep.subr.mxu0 0.0
    %352 = vmatpush1.xpose.msra.mxu0 0.0
    %353 = vmatprep.subr.mxu0 0.0
    %354 = vmatpush1.xpose.msra.mxu0 0.0
    %355 = vmatprep.subr.mxu0 0.0
    %356 = vmatpush1.xpose.msra.mxu0 0.0
    %357 = vmatprep.subr.mxu0 0.0
    %358 = vmatpush1.xpose.msra.mxu0 0.0
    %359 = vmatprep.subr.mxu0 0.0
    %360 = vmatpush1.xpose.msra.mxu0 0.0
    %361 = vmatprep.mubr.f32.mxu0 0.0
    %362 = vmatmul.mubr.f32.gmra.mrb[0].mxu0 %v293
    %v363 = vpop.f32.mrb[0].mxu0
    %v364 = vadd.f32 0.0, %v363
    %v365 = vpop.f32.mrb[0].mxu0
    %366 = vdwg.mxu0
    %v367 = vmul.f32 %v286, 0.17677669
    %v368 = vmul.f32 %v364, 0.17677669
    %vm369 = vcmask 64512
    %v370 = vsel %vm369, %v367, -inf
    %371 = vmax.xlane.f32.xlu0 %v370
    %v372 = vpop.xlane.xlu0 %371
    %v373 = vsel %vm369, %v368, -inf
    %374 = vmax.xlane.f32.xlu0 %v373
    %v375 = vpop.xlane.xlu0 %374
    %v376 = vsub.f32 %v367, %v372
    %v377 = vsub.f32 %v368, %v375
    %v378 = vmul.f32 %v376, 1.442695
    %v379 = vpow.pop %v378
    %v380 = vmul.f32 %v377, 1.442695
    %v381 = vpow.pop %v380
    %v382 = vsel %vm369, %v379, 0.0
    %383 = vadd.xlane.f32.xlu0 %v382
    %v384 = vpop.xlane.xlu0 %383
    %v385 = vsel %vm369, %v381, 0.0
    %386 = vadd.xlane.f32.xlu0 %v385
    %v387 = vpop.xlane.xlu0 %386
    %v388 = vrcp.pop %v384
    %v389 = vrcp.pop %v387
    %v390 = vmul.f32 %v379, %v388
    %v391 = vmul.f32 %v381, %v389
    %393 = vrot.lane.b32.xlu0 %v209, 64
    %v394 = vpop.permute.xlu0 %393
    %v397 = vsel %vm369, %v390, 0
    %399 = vmatprep.subr.mxu0 0.0
    %400 = vmatpush1.msra.mxu0 %v394
    %401 = vmatprep.subr.mxu0 0.0
    %402 = vmatpush1.msra.mxu0 0.0
    %403 = vmatprep.subr.mxu0 0.0
    %404 = vmatpush1.msra.mxu0 0.0
    %405 = vmatprep.subr.mxu0 0.0
    %406 = vmatpush1.msra.mxu0 0.0
    %407 = vmatprep.subr.mxu0 0.0
    %408 = vmatpush1.msra.mxu0 0.0
    %409 = vmatprep.subr.mxu0 0.0
    %410 = vmatpush1.msra.mxu0 0.0
    %411 = vmatprep.subr.mxu0 0.0
    %412 = vmatpush1.msra.mxu0 0.0
    %413 = vmatprep.subr.mxu0 0.0
    %414 = vmatpush1.msra.mxu0 0.0
    %415 = vmatprep.subr.mxu0 0.0
    %416 = vmatpush1.msra.mxu0 0.0
    %417 = vmatprep.subr.mxu0 0.0
    %418 = vmatpush1.msra.mxu0 0.0
    %419 = vmatprep.subr.mxu0 0.0
    %420 = vmatpush1.msra.mxu0 0.0
    %421 = vmatprep.subr.mxu0 0.0
    %422 = vmatpush1.msra.mxu0 0.0
    %423 = vmatprep.subr.mxu0 0.0
    %424 = vmatpush1.msra.mxu0 0.0
    %425 = vmatprep.subr.mxu0 0.0
    %426 = vmatpush1.msra.mxu0 0.0
    %427 = vmatprep.subr.mxu0 0.0
    %428 = vmatpush1.msra.mxu0 0.0
    %429 = vmatprep.subr.mxu0 0.0
    %430 = vmatpush1.msra.mxu0 0.0
    %431 = vmatprep.subr.mxu0 0.0
    %432 = vmatpush1.msra.mxu0 0.0
    %433 = vmatprep.subr.mxu0 0.0
    %434 = vmatpush1.msra.mxu0 0.0
    %435 = vmatprep.subr.mxu0 0.0
    %436 = vmatpush1.msra.mxu0 0.0
    %437 = vmatprep.subr.mxu0 0.0
    %438 = vmatpush1.msra.mxu0 0.0
    %439 = vmatprep.subr.mxu0 0.0
    %440 = vmatpush1.msra.mxu0 0.0
    %441 = vmatprep.subr.mxu0 0.0
    %442 = vmatpush1.msra.mxu0 0.0
    %443 = vmatprep.subr.mxu0 0.0
    %444 = vmatpush1.msra.mxu0 0.0
    %445 = vmatprep.subr.mxu0 0.0
    %446 = vmatpush1.msra.mxu0 0.0
    %447 = vmatprep.subr.mxu0 0.0
    %448 = vmatpush1.msra.mxu0 0.0
    %449 = vmatprep.subr.mxu0 0.0
    %450 = vmatpush1.msra.mxu0 0.0
    %451 = vmatprep.subr.mxu0 0.0
    %452 = vmatpush1.msra.mxu0 0.0
    %453 = vmatprep.subr.mxu0 0.0
    %454 = vmatpush1.msra.mxu0 0.0
    %455 = vmatprep.subr.mxu0 0.0
    %456 = vmatpush1.msra.mxu0 0.0
    %457 = vmatprep.subr.mxu0 0.0
    %458 = vmatpush1.msra.mxu0 0.0
    %459 = vmatprep.subr.mxu0 0.0
    %460 = vmatpush1.msra.mxu0 0.0
    %461 = vmatprep.subr.mxu0 0.0
    %462 = vmatpush1.msra.mxu0 0.0
    %463 = vmatprep.mubr.f32.mxu0 0.0
    %464 = vmatmul.mubr.f32.gmra.mrb[0].mxu0 %v397
    %v465 = vpop.f32.mrb[0].mxu0
    %v466 = vadd.f32 0.0, %v465
    %v467 = vpop.f32.mrb[0].mxu0
    %468 = vdwg.mxu0
    %470 = vrot.lane.b32.xlu0 %v210, 64
    %v471 = vpop.permute.xlu0 %470
    %v474 = vsel %vm369, %v391, 0
    %476 = vmatprep.subr.mxu0 0.0
    %477 = vmatpush1.msra.mxu0 %v471
    %478 = vmatprep.subr.mxu0 0.0
    %479 = vmatpush1.msra.mxu0 0.0
    %480 = vmatprep.subr.mxu0 0.0
    %481 = vmatpush1.msra.mxu0 0.0
    %482 = vmatprep.subr.mxu0 0.0
    %483 = vmatpush1.msra.mxu0 0.0
    %484 = vmatprep.subr.mxu0 0.0
    %485 = vmatpush1.msra.mxu0 0.0
    %486 = vmatprep.subr.mxu0 0.0
    %487 = vmatpush1.msra.mxu0 0.0
    %488 = vmatprep.subr.mxu0 0.0
    %489 = vmatpush1.msra.mxu0 0.0
    %490 = vmatprep.subr.mxu0 0.0
    %491 = vmatpush1.msra.mxu0 0.0
    %492 = vmatprep.subr.mxu0 0.0
    %493 = vmatpush1.msra.mxu0 0.0
    %494 = vmatprep.subr.mxu0 0.0
    %495 = vmatpush1.msra.mxu0 0.0
    %496 = vmatprep.subr.mxu0 0.0
    %497 = vmatpush1.msra.mxu0 0.0
    %498 = vmatprep.subr.mxu0 0.0
    %499 = vmatpush1.msra.mxu0 0.0
    %500 = vmatprep.subr.mxu0 0.0
    %501 = vmatpush1.msra.mxu0 0.0
    %502 = vmatprep.subr.mxu0 0.0
    %503 = vmatpush1.msra.mxu0 0.0
    %504 = vmatprep.subr.mxu0 0.0
    %505 = vmatpush1.msra.mxu0 0.0
    %506 = vmatprep.subr.mxu0 0.0
    %507 = vmatpush1.msra.mxu0 0.0
    %508 = vmatprep.subr.mxu0 0.0
    %509 = vmatpush1.msra.mxu0 0.0
    %510 = vmatprep.subr.mxu0 0.0
    %511 = vmatpush1.msra.mxu0 0.0
    %512 = vmatprep.subr.mxu0 0.0
    %513 = vmatpush1.msra.mxu0 0.0
    %514 = vmatprep.subr.mxu0 0.0
    %515 = vmatpush1.msra.mxu0 0.0
    %516 = vmatprep.subr.mxu0 0.0
    %517 = vmatpush1.msra.mxu0 0.0
    %518 = vmatprep.subr.mxu0 0.0
    %519 = vmatpush1.msra.mxu0 0.0
    %520 = vmatprep.subr.mxu0 0.0
    %521 = vmatpush1.msra.mxu0 0.0
    %522 = vmatprep.subr.mxu0 0.0
    %523 = vmatpush1.msra.mxu0 0.0
    %524 = vmatprep.subr.mxu0 0.0
    %525 = vmatpush1.msra.mxu0 0.0
    %526 = vmatprep.subr.mxu0 0.0
    %527 = vmatpush1.msra.mxu0 0.0
    %528 = vmatprep.subr.mxu0 0.0
    %529 = vmatpush1.msra.mxu0 0.0
    %530 = vmatprep.subr.mxu0 0.0
    %531 = vmatpush1.msra.mxu0 0.0
    %532 = vmatprep.subr.mxu0 0.0
    %533 = vmatpush1.msra.mxu0 0.0
    %534 = vmatprep.subr.mxu0 0.0
    %535 = vmatpush1.msra.mxu0 0.0
    %536 = vmatprep.subr.mxu0 0.0
    %537 = vmatpush1.msra.mxu0 0.0
    %538 = vmatprep.subr.mxu0 0.0
    %539 = vmatpush1.msra.mxu0 0.0
    %540 = vmatprep.mubr.f32.mxu0 0.0
    %541 = vmatmul.mubr.f32.gmra.mrb[0].mxu0 %v474
    %v542 = vpop.f32.mrb[0].mxu0
    %v543 = vadd.f32 0.0, %v542
    %v544 = vpop.f32.mrb[0].mxu0
    %545 = vdwg.mxu0
    %v546 = vadd.f32 %v76, %v466
    %v547 = vadd.f32 %v77, %v543
    %v548 = vsel %vm34, %v546, 0.0
    %549 = vadd.xlane.f32.xlu0 %v548
    %v550 = vpop.xlane.xlu0 %549
    %v551 = vsel %vm34, %v547, 0.0
    %552 = vadd.xlane.f32.xlu0 %v551
    %v553 = vpop.xlane.xlu0 %552
    %v554 = vmul.f32 %v550, %v41
    %v555 = vmul.f32 %v553, %v41
    %v556 = vsub.f32 %v546, %v554
    %v557 = vsub.f32 %v547, %v555
    %v558 = vmul.f32 %v556, %v556
    %v559 = vmul.f32 %v557, %v557
    %v560 = vsel %vm34, %v558, 0.0
    %561 = vadd.xlane.f32.xlu0 %v560
    %v562 = vpop.xlane.xlu0 %561
    %v563 = vsel %vm34, %v559, 0.0
    %564 = vadd.xlane.f32.xlu0 %v563
    %v565 = vpop.xlane.xlu0 %564
    %v566 = vmul.f32 %v562, %v41
    %v567 = vmul.f32 %v565, %v41
    %v568 = vadd.f32 %v566, 1e-05
    %v569 = vadd.f32 %v567, 1e-05
    %v570 = vrsqrt.pop %v568
    %v571 = vrsqrt.pop %v569
    %v572 = vmul.f32 %v556, %v570
    %v573 = vmul.f32 %v557, %v571
    %v574 = vlaneseq
    %v575 = vshrl.u32 %v574, 7
    %v576 = vsub.s32 3, %v575
    %v577 = vrot.slane %v82, %v576
    %v578 = vmul.f32 %v572, %v577
    %v579 = vmul.f32 %v573, %v577
    %v580 = vlaneseq
    %v581 = vshrl.u32 %v580, 7
    %v582 = vsub.s32 4, %v581
    %v583 = vrot.slane %v82, %v582
    %v584 = vadd.f32 %v578, %v583
    %v585 = vadd.f32 %v579, %v583
    %v587 = vlaneseq
    %v588 = vshrl.u32 %v587, 7
    %v589 = vsub.s32 0, %v588
    %v590 = vrot.slane %v87, %v589
    %v593 = vsel %vm34, %v584, 0
    %v596 = vsel %vm34, %v585, 0
    %598 = vmatprep.subr.mxu0 0.0
    %599 = vmatpush1.msra.mxu0 %v83
    %600 = vmatprep.subr.mxu0 0.0
    %601 = vmatpush1.msra.mxu0 %v84
    %602 = vmatprep.subr.mxu0 0.0
    %603 = vmatpush1.msra.mxu0 %v85
    %604 = vmatprep.subr.mxu0 0.0
    %605 = vmatpush1.msra.mxu0 %v86
    %606 = vmatprep.subr.mxu0 0.0
    %607 = vmatpush1.msra.mxu0 0.0
    %608 = vmatprep.subr.mxu0 0.0
    %609 = vmatpush1.msra.mxu0 0.0
    %610 = vmatprep.subr.mxu0 0.0
    %611 = vmatpush1.msra.mxu0 0.0
    %612 = vmatprep.subr.mxu0 0.0
    %613 = vmatpush1.msra.mxu0 0.0
    %614 = vmatprep.subr.mxu0 0.0
    %615 = vmatpush1.msra.mxu0 0.0
    %616 = vmatprep.subr.mxu0 0.0
    %617 = vmatpush1.msra.mxu0 0.0
    %618 = vmatprep.subr.mxu0 0.0
    %619 = vmatpush1.msra.mxu0 0.0
    %620 = vmatprep.subr.mxu0 0.0
    %621 = vmatpush1.msra.mxu0 0.0
    %622 = vmatprep.subr.mxu0 0.0
    %623 = vmatpush1.msra.mxu0 0.0
    %624 = vmatprep.subr.mxu0 0.0
    %625 = vmatpush1.msra.mxu0 0.0
    %626 = vmatprep.subr.mxu0 0.0
    %627 = vmatpush1.msra.mxu0 0.0
    %628 = vmatprep.subr.mxu0 0.0
    %629 = vmatpush1.msra.mxu0 0.0
    %630 = vmatprep.subr.mxu0 0.0
    %631 = vmatpush1.msra.mxu0 0.0
    %632 = vmatprep.subr.mxu0 0.0
    %633 = vmatpush1.msra.mxu0 0.0
    %634 = vmatprep.subr.mxu0 0.0
    %635 = vmatpush1.msra.mxu0 0.0
    %636 = vmatprep.subr.mxu0 0.0
    %637 = vmatpush1.msra.mxu0 0.0
    %638 = vmatprep.subr.mxu0 0.0
    %639 = vmatpush1.msra.mxu0 0.0
    %640 = vmatprep.subr.mxu0 0.0
    %641 = vmatpush1.msra.mxu0 0.0
    %642 = vmatprep.subr.mxu0 0.0
    %643 = vmatpush1.msra.mxu0 0.0
    %644 = vmatprep.subr.mxu0 0.0
    %645 = vmatpush1.msra.mxu0 0.0
    %646 = vmatprep.subr.mxu0 0.0
    %647 = vmatpush1.msra.mxu0 0.0
    %648 = vmatprep.subr.mxu0 0.0
    %649 = vmatpush1.msra.mxu0 0.0
    %650 = vmatprep.subr.mxu0 0.0
    %651 = vmatpush1.msra.mxu0 0.0
    %652 = vmatprep.subr.mxu0 0.0
    %653 = vmatpush1.msra.mxu0 0.0
    %654 = vmatprep.subr.mxu0 0.0
    %655 = vmatpush1.msra.mxu0 0.0
    %656 = vmatprep.subr.mxu0 0.0
    %657 = vmatpush1.msra.mxu0 0.0
    %658 = vmatprep.subr.mxu0 0.0
    %659 = vmatpush1.msra.mxu0 0.0
    %660 = vmatprep.subr.mxu0 0.0
    %661 = vmatpush1.msra.mxu0 0.0
    %662 = vmatprep.mubr.f32.mxu0 0.0
    %663 = vmatmul.mubr.f32.gmra.mrb[0].mxu0 %v593
    %v664 = vpop.f32.mrb[0].mxu0
    %v665 = vadd.f32 %v590, %v664
    %v666 = vpop.f32.mrb[0].mxu0
    %667 = vmatprep.mubr.f32.mxu0 0.0
    %668 = vmatmul.mubr.f32.gmra.mrb[0].mxu0 %v596
    %v669 = vpop.f32.mrb[0].mxu0
    %v670 = vadd.f32 %v590, %v669
    %v671 = vpop.f32.mrb[0].mxu0
    %672 = vdwg.mxu0
    %v673 = vmax.f32 %v665, 0.0
    %v674 = vmax.f32 %v670, 0.0
    %v675 = vlaneseq
    %v676 = vshrl.u32 %v675, 7
    %v677 = vsub.s32 5, %v676
    %v678 = vrot.slane %v82, %v677
    %679 = vmatprep.subr.mxu0 0.0
    %680 = vmatpush1.msra.mxu0 %v88
    %681 = vmatprep.subr.mxu0 0.0
    %682 = vmatpush1.msra.mxu0 %v89
    %683 = vmatprep.subr.mxu0 0.0
    %684 = vmatpush1.msra.mxu0 %v90
    %685 = vmatprep.subr.mxu0 0.0
    %686 = vmatpush1.msra.mxu0 %v91
    %687 = vmatprep.subr.mxu0 0.0
    %688 = vmatpush1.msra.mxu0 %v92
    %689 = vmatprep.subr.mxu0 0.0
    %690 = vmatpush1.msra.mxu0 %v93
    %691 = vmatprep.subr.mxu0 0.0
    %692 = vmatpush1.msra.mxu0 %v94
    %693 = vmatprep.subr.mxu0 0.0
    %694 = vmatpush1.msra.mxu0 %v95
    %695 = vmatprep.subr.mxu0 0.0
    %696 = vmatpush1.msra.mxu0 %v96
    %697 = vmatprep.subr.mxu0 0.0
    %698 = vmatpush1.msra.mxu0 %v97
    %699 = vmatprep.subr.mxu0 0.0
    %700 = vmatpush1.msra.mxu0 %v98
    %701 = vmatprep.subr.mxu0 0.0
    %702 = vmatpush1.msra.mxu0 %v99
    %703 = vmatprep.subr.mxu0 0.0
    %704 = vmatpush1.msra.mxu0 %v100
    %705 = vmatprep.subr.mxu0 0.0
    %706 = vmatpush1.msra.mxu0 %v101
    %707 = vmatprep.subr.mxu0 0.0
    %708 = vmatpush1.msra.mxu0 %v102
    %709 = vmatprep.subr.mxu0 0.0
    %710 = vmatpush1.msra.mxu0 %v103
    %711 = vmatprep.subr.mxu0 0.0
    %712 = vmatpush1.msra.mxu0 0.0
    %713 = vmatprep.subr.mxu0 0.0
    %714 = vmatpush1.msra.mxu0 0.0
    %715 = vmatprep.subr.mxu0 0.0
    %716 = vmatpush1.msra.mxu0 0.0
    %717 = vmatprep.subr.mxu0 0.0
    %718 = vmatpush1.msra.mxu0 0.0
    %719 = vmatprep.subr.mxu0 0.0
    %720 = vmatpush1.msra.mxu0 0.0
    %721 = vmatprep.subr.mxu0 0.0
    %722 = vmatpush1.msra.mxu0 0.0
    %723 = vmatprep.subr.mxu0 0.0
    %724 = vmatpush1.msra.mxu0 0.0
    %725 = vmatprep.subr.mxu0 0.0
    %726 = vmatpush1.msra.mxu0 0.0
    %727 = vmatprep.subr.mxu0 0.0
    %728 = vmatpush1.msra.mxu0 0.0
    %729 = vmatprep.subr.mxu0 0.0
    %730 = vmatpush1.msra.mxu0 0.0
    %731 = vmatprep.subr.mxu0 0.0
    %732 = vmatpush1.msra.mxu0 0.0
    %733 = vmatprep.subr.mxu0 0.0
    %734 = vmatpush1.msra.mxu0 0.0
    %735 = vmatprep.subr.mxu0 0.0
    %736 = vmatpush1.msra.mxu0 0.0
    %737 = vmatprep.subr.mxu0 0.0
    %738 = vmatpush1.msra.mxu0 0.0
    %739 = vmatprep.subr.mxu0 0.0
    %740 = vmatpush1.msra.mxu0 0.0
    %741 = vmatprep.subr.mxu0 0.0
    %742 = vmatpush1.msra.mxu0 0.0
    %743 = vmatprep.mubr.f32.mxu0 0.0
    %744 = vmatmul.mubr.f32.gmra.mrb[0].mxu0 %v673
    %v745 = vpop.f32.mrb[0].mxu0
    %v746 = vadd.f32 %v678, %v745
    %v747 = vpop.f32.mrb[0].mxu0
    %748 = vmatprep.mubr.f32.mxu0 0.0
    %749 = vmatmul.mubr.f32.gmra.mrb[0].mxu0 %v674
    %v750 = vpop.f32.mrb[0].mxu0
    %v751 = vadd.f32 %v678, %v750
    %v752 = vpop.f32.mrb[0].mxu0
    %753 = vdwg.mxu0
    %v754 = vadd.f32 %v584, %v746
    %v755 = vadd.f32 %v585, %v751
    %v756 = vsel %vm34, %v754, 0.0
    %757 = vadd.xlane.f32.xlu0 %v756
    %v758 = vpop.xlane.xlu0 %757
    %v759 = vsel %vm34, %v755, 0.0
    %760 = vadd.xlane.f32.xlu0 %v759
    %v761 = vpop.xlane.xlu0 %760
    %v762 = vmul.f32 %v758, %v41
    %v763 = vmul.f32 %v761, %v41
    %v764 = vsub.f32 %v754, %v762
    %v765 = vsub.f32 %v755, %v763
    %v766 = vmul.f32 %v764, %v764
    %v767 = vmul.f32 %v765, %v765
    %v768 = vsel %vm34, %v766, 0.0
    %769 = vadd.xlane.f32.xlu0 %v768
    %v770 = vpop.xlane.xlu0 %769
    %v771 = vsel %vm34, %v767, 0.0
    %772 = vadd.xlane.f32.xlu0 %v771
    %v773 = vpop.xlane.xlu0 %772
    %v774 = vmul.f32 %v770, %v41
    %v775 = vmul.f32 %v773, %v41
    %v776 = vadd.f32 %v774, 1e-05
    %v777 = vadd.f32 %v775, 1e-05
    %v778 = vrsqrt.pop %v776
    %v779 = vrsqrt.pop %v777
    %v780 = vmul.f32 %v764, %v778
    %v781 = vmul.f32 %v765, %v779
    %v782 = vlaneseq
    %v783 = vshrl.u32 %v782, 7
    %v784 = vsub.s32 6, %v783
    %v785 = vrot.slane %v82, %v784
    %v786 = vmul.f32 %v780, %v785
    %v787 = vmul.f32 %v781, %v785
    %v788 = vlaneseq
    %v789 = vshrl.u32 %v788, 7
    %v790 = vsub.s32 7, %v789
    %v791 = vrot.slane %v82, %v790
    %v792 = vadd.f32 %v786, %v791
    %v793 = vadd.f32 %v787, %v791
    %v794 = vadd.f32 %v76, %v792
    %v795 = vadd.f32 %v77, %v793
    %s796 = scalar_lea.vmem %s3, 32
    %v797 = vld [vmem:[%s796] sm:$0xff]
    %v798 = vld [vmem:[%s796 + $0x8] sm:$0xff]
    %v799 = vld [vmem:[%s796 + $0x10] sm:$0xff]
    %v800 = vld [vmem:[%s796 + $0x18] sm:$0xff]
    %s801 = scalar_lea.vmem %s4, 8
    %v802 = vld [vmem:[%s801] sm:$0xff]
    %s803 = scalar_lea.vmem %s5, 32
    %v804 = vld [vmem:[%s803] sm:$0xff]
    %v805 = vld [vmem:[%s803 + $0x8] sm:$0xff]
    %v806 = vld [vmem:[%s803 + $0x10] sm:$0xff]
    %v807 = vld [vmem:[%s803 + $0x18] sm:$0xff]
    %s808 = scalar_lea.vmem %s6, 1
    %v809 = vld [vmem:[%s808] sm:$0x1]
    %s810 = scalar_lea.vmem %s7, 128
    %v811 = vld [vmem:[%s810] sm:$0xff]
    %v812 = vld [vmem:[%s810 + $0x8] sm:$0xff]
    %v813 = vld [vmem:[%s810 + $0x10] sm:$0xff]
    %v814 = vld [vmem:[%s810 + $0x18] sm:$0xff]
    %v815 = vld [vmem:[%s810 + $0x20] sm:$0xff]
    %v816 = vld [vmem:[%s810 + $0x28] sm:$0xff]
    %v817 = vld [vmem:[%s810 + $0x30] sm:$0xff]
    %v818 = vld [vmem:[%s810 + $0x38] sm:$0xff]
    %v819 = vld [vmem:[%s810 + $0x40] sm:$0xff]
    %v820 = vld [vmem:[%s810 + $0x48] sm:$0xff]
    %v821 = vld [vmem:[%s810 + $0x50] sm:$0xff]
    %v822 = vld [vmem:[%s810 + $0x58] sm:$0xff]
    %v823 = vld [vmem:[%s810 + $0x60] sm:$0xff]
    %v824 = vld [vmem:[%s810 + $0x68] sm:$0xff]
    %v825 = vld [vmem:[%s810 + $0x70] sm:$0xff]
    %v826 = vld [vmem:[%s810 + $0x78] sm:$0xff]
    %v828 = vsel %vm34, %v794, 0
    %v831 = vsel %vm34, %v795, 0
    %833 = vmatprep.subr.mxu0 0.0
    %834 = vmatpush1.msra.mxu0 %v797
    %835 = vmatprep.subr.mxu0 0.0
    %836 = vmatpush1.msra.mxu0 %v798
    %837 = vmatprep.subr.mxu0 0.0
    %838 = vmatpush1.msra.mxu0 %v799
    %839 = vmatprep.subr.mxu0 0.0
    %840 = vmatpush1.msra.mxu0 %v800
    %841 = vmatprep.subr.mxu0 0.0
    %842 = vmatpush1.msra.mxu0 0.0
    %843 = vmatprep.subr.mxu0 0.0
    %844 = vmatpush1.msra.mxu0 0.0
    %845 = vmatprep.subr.mxu0 0.0
    %846 = vmatpush1.msra.mxu0 0.0
    %847 = vmatprep.subr.mxu0 0.0
    %848 = vmatpush1.msra.mxu0 0.0
    %849 = vmatprep.subr.mxu0 0.0
    %850 = vmatpush1.msra.mxu0 0.0
    %851 = vmatprep.subr.mxu0 0.0
    %852 = vmatpush1.msra.mxu0 0.0
    %853 = vmatprep.subr.mxu0 0.0
    %854 = vmatpush1.msra.mxu0 0.0
    %855 = vmatprep.subr.mxu0 0.0
    %856 = vmatpush1.msra.mxu0 0.0
    %857 = vmatprep.subr.mxu0 0.0
    %858 = vmatpush1.msra.mxu0 0.0
    %859 = vmatprep.subr.mxu0 0.0
    %860 = vmatpush1.msra.mxu0 0.0
    %861 = vmatprep.subr.mxu0 0.0
    %862 = vmatpush1.msra.mxu0 0.0
    %863 = vmatprep.subr.mxu0 0.0
    %864 = vmatpush1.msra.mxu0 0.0
    %865 = vmatprep.subr.mxu0 0.0
    %866 = vmatpush1.msra.mxu0 0.0
    %867 = vmatprep.subr.mxu0 0.0
    %868 = vmatpush1.msra.mxu0 0.0
    %869 = vmatprep.subr.mxu0 0.0
    %870 = vmatpush1.msra.mxu0 0.0
    %871 = vmatprep.subr.mxu0 0.0
    %872 = vmatpush1.msra.mxu0 0.0
    %873 = vmatprep.subr.mxu0 0.0
    %874 = vmatpush1.msra.mxu0 0.0
    %875 = vmatprep.subr.mxu0 0.0
    %876 = vmatpush1.msra.mxu0 0.0
    %877 = vmatprep.subr.mxu0 0.0
    %878 = vmatpush1.msra.mxu0 0.0
    %879 = vmatprep.subr.mxu0 0.0
    %880 = vmatpush1.msra.mxu0 0.0
    %881 = vmatprep.subr.mxu0 0.0
    %882 = vmatpush1.msra.mxu0 0.0
    %883 = vmatprep.subr.mxu0 0.0
    %884 = vmatpush1.msra.mxu0 0.0
    %885 = vmatprep.subr.mxu0 0.0
    %886 = vmatpush1.msra.mxu0 0.0
    %887 = vmatprep.subr.mxu0 0.0
    %888 = vmatpush1.msra.mxu0 0.0
    %889 = vmatprep.subr.mxu0 0.0
    %890 = vmatpush1.msra.mxu0 0.0
    %891 = vmatprep.subr.mxu0 0.0
    %892 = vmatpush1.msra.mxu0 0.0
    %893 = vmatprep.subr.mxu0 0.0
    %894 = vmatpush1.msra.mxu0 0.0
    %895 = vmatprep.subr.mxu0 0.0
    %896 = vmatpush1.msra.mxu0 0.0
    %897 = vmatprep.mubr.f32.mxu0 0.0
    %898 = vmatmul.mubr.f32.gmra.mrb[0].mxu0 %v828
    %v899 = vpop.f32.mrb[0].mxu0
    %v900 = vadd.f32 0.0, %v899
    %v901 = vpop.f32.mrb[0].mxu0
    %902 = vmatprep.mubr.f32.mxu0 0.0
    %903 = vmatmul.mubr.f32.gmra.mrb[0].mxu0 %v831
    %v904 = vpop.f32.mrb[0].mxu0
    %v905 = vadd.f32 0.0, %v904
    %v906 = vpop.f32.mrb[0].mxu0
    %907 = vdwg.mxu0
    %v908 = vlaneseq
    %v909 = vshrl.u32 %v908, 7
    %v910 = vsub.s32 0, %v909
    %v911 = vrot.slane %v802, %v910
    %v912 = vadd.f32 %v900, %v911
    %v913 = vadd.f32 %v905, %v911
    %v914 = vlaneseq
    %v915 = vshrl.u32 %v914, 7
    %v916 = vsub.s32 1, %v915
    %v917 = vrot.slane %v802, %v916
    %919 = vrot.lane.b32.xlu0 %v917, 32
    %v920 = vpop.permute.xlu0 %919
    %v922 = vadd.f32 %v900, %v920
    %v923 = vadd.f32 %v905, %v920
    %v924 = vlaneseq
    %v925 = vshrl.u32 %v924, 7
    %v926 = vsub.s32 2, %v925
    %v927 = vrot.slane %v802, %v926
    %929 = vrot.lane.b32.xlu0 %v927, 64
    %v930 = vpop.permute.xlu0 %929
    %v932 = vadd.f32 %v900, %v930
    %v933 = vadd.f32 %v905, %v930
    %935 = vrot.lane.b32.xlu0 %v922, 96
    %v936 = vpop.permute.xlu0 %935
    %v938 = vsel %vm34, %v912, 0
    %v940 = vsel %vm34, %v936, 0
    %942 = vmatprep.subr.mxu0 0.0
    %943 = vmatpush1.xpose.msra.mxu0 %v940
    %944 = vmatprep.subr.mxu0 0.0
    %945 = vmatpush1.xpose.msra.mxu0 0.0
    %946 = vmatprep.subr.mxu0 0.0
    %947 = vmatpush1.xpose.msra.mxu0 0.0
    %948 = vmatprep.subr.mxu0 0.0
    %949 = vmatpush1.xpose.msra.mxu0 0.0
    %950 = vmatprep.subr.mxu0 0.0
    %951 = vmatpush1.xpose.msra.mxu0 0.0
    %952 = vmatprep.subr.mxu0 0.0
    %953 = vmatpush1.xpose.msra.mxu0 0.0
    %954 = vmatprep.subr.mxu0 0.0
    %955 = vmatpush1.xpose.msra.mxu0 0.0
    %956 = vmatprep.subr.mxu0 0.0
    %957 = vmatpush1.xpose.msra.mxu0 0.0
    %958 = vmatprep.subr.mxu0 0.0
    %959 = vmatpush1.xpose.msra.mxu0 0.0
    %960 = vmatprep.subr.mxu0 0.0
    %961 = vmatpush1.xpose.msra.mxu0 0.0
    %962 = vmatprep.subr.mxu0 0.0
    %963 = vmatpush1.xpose.msra.mxu0 0.0
    %964 = vmatprep.subr.mxu0 0.0
    %965 = vmatpush1.xpose.msra.mxu0 0.0
    %966 = vmatprep.subr.mxu0 0.0
    %967 = vmatpush1.xpose.msra.mxu0 0.0
    %968 = vmatprep.subr.mxu0 0.0
    %969 = vmatpush1.xpose.msra.mxu0 0.0
    %970 = vmatprep.subr.mxu0 0.0
    %971 = vmatpush1.xpose.msra.mxu0 0.0
    %972 = vmatprep.subr.mxu0 0.0
    %973 = vmatpush1.xpose.msra.mxu0 0.0
    %974 = vmatprep.subr.mxu0 0.0
    %975 = vmatpush1.xpose.msra.mxu0 0.0
    %976 = vmatprep.subr.mxu0 0.0
    %977 = vmatpush1.xpose.msra.mxu0 0.0
    %978 = vmatprep.subr.mxu0 0.0
    %979 = vmatpush1.xpose.msra.mxu0 0.0
    %980 = vmatprep.subr.mxu0 0.0
    %981 = vmatpush1.xpose.msra.mxu0 0.0
    %982 = vmatprep.subr.mxu0 0.0
    %983 = vmatpush1.xpose.msra.mxu0 0.0
    %984 = vmatprep.subr.mxu0 0.0
    %985 = vmatpush1.xpose.msra.mxu0 0.0
    %986 = vmatprep.subr.mxu0 0.0
    %987 = vmatpush1.xpose.msra.mxu0 0.0
    %988 = vmatprep.subr.mxu0 0.0
    %989 = vmatpush1.xpose.msra.mxu0 0.0
    %990 = vmatprep.subr.mxu0 0.0
    %991 = vmatpush1.xpose.msra.mxu0 0.0
    %992 = vmatprep.subr.mxu0 0.0
    %993 = vmatpush1.xpose.msra.mxu0 0.0
    %994 = vmatprep.subr.mxu0 0.0
    %995 = vmatpush1.xpose.msra.mxu0 0.0
    %996 = vmatprep.subr.mxu0 0.0
    %997 = vmatpush1.xpose.msra.mxu0 0.0
    %998 = vmatprep.subr.mxu0 0.0
    %999 = vmatpush1.xpose.msra.mxu0 0.0
    %1000 = vmatprep.subr.mxu0 0.0
    %1001 = vmatpush1.xpose.msra.mxu0 0.0
    %1002 = vmatprep.subr.mxu0 0.0
    %1003 = vmatpush1.xpose.msra.mxu0 0.0
    %1004 = vmatprep.subr.mxu0 0.0
    %1005 = vmatpush1.xpose.msra.mxu0 0.0
    %1006 = vmatprep.mubr.f32.mxu0 0.0
    %1007 = vmatmul.mubr.f32.gmra.mrb[0].mxu0 %v938
    %v1008 = vpop.f32.mrb[0].mxu0
    %v1009 = vadd.f32 0.0, %v1008
    %v1010 = vpop.f32.mrb[0].mxu0
    %1011 = vdwg.mxu0
    %1013 = vrot.lane.b32.xlu0 %v923, 96
    %v1014 = vpop.permute.xlu0 %1013
    %v1016 = vsel %vm34, %v913, 0
    %v1018 = vsel %vm34, %v1014, 0
    %1020 = vmatprep.subr.mxu0 0.0
    %1021 = vmatpush1.xpose.msra.mxu0 %v1018
    %1022 = vmatprep.subr.mxu0 0.0
    %1023 = vmatpush1.xpose.msra.mxu0 0.0
    %1024 = vmatprep.subr.mxu0 0.0
    %1025 = vmatpush1.xpose.msra.mxu0 0.0
    %1026 = vmatprep.subr.mxu0 0.0
    %1027 = vmatpush1.xpose.msra.mxu0 0.0
    %1028 = vmatprep.subr.mxu0 0.0
    %1029 = vmatpush1.xpose.msra.mxu0 0.0
    %1030 = vmatprep.subr.mxu0 0.0
    %1031 = vmatpush1.xpose.msra.mxu0 0.0
    %1032 = vmatprep.subr.mxu0 0.0
    %1033 = vmatpush1.xpose.msra.mxu0 0.0
    %1034 = vmatprep.subr.mxu0 0.0
    %1035 = vmatpush1.xpose.msra.mxu0 0.0
    %1036 = vmatprep.subr.mxu0 0.0
    %1037 = vmatpush1.xpose.msra.mxu0 0.0
    %1038 = vmatprep.subr.mxu0 0.0
    %1039 = vmatpush1.xpose.msra.mxu0 0.0
    %1040 = vmatprep.subr.mxu0 0.0
    %1041 = vmatpush1.xpose.msra.mxu0 0.0
    %1042 = vmatprep.subr.mxu0 0.0
    %1043 = vmatpush1.xpose.msra.mxu0 0.0
    %1044 = vmatprep.subr.mxu0 0.0
    %1045 = vmatpush1.xpose.msra.mxu0 0.0
    %1046 = vmatprep.subr.mxu0 0.0
    %1047 = vmatpush1.xpose.msra.mxu0 0.0
    %1048 = vmatprep.subr.mxu0 0.0
    %1049 = vmatpush1.xpose.msra.mxu0 0.0
    %1050 = vmatprep.subr.mxu0 0.0
    %1051 = vmatpush1.xpose.msra.mxu0 0.0
    %1052 = vmatprep.subr.mxu0 0.0
    %1053 = vmatpush1.xpose.msra.mxu0 0.0
    %1054 = vmatprep.subr.mxu0 0.0
    %1055 = vmatpush1.xpose.msra.mxu0 0.0
    %1056 = vmatprep.subr.mxu0 0.0
    %1057 = vmatpush1.xpose.msra.mxu0 0.0
    %1058 = vmatprep.subr.mxu0 0.0
    %1059 = vmatpush1.xpose.msra.mxu0 0.0
    %1060 = vmatprep.subr.mxu0 0.0
    %1061 = vmatpush1.xpose.msra.mxu0 0.0
    %1062 = vmatprep.subr.mxu0 0.0
    %1063 = vmatpush1.xpose.msra.mxu0 0.0
    %1064 = vmatprep.subr.mxu0 0.0
    %1065 = vmatpush1.xpose.msra.mxu0 0.0
    %1066 = vmatprep.subr.mxu0 0.0
    %1067 = vmatpush1.xpose.msra.mxu0 0.0
    %1068 = vmatprep.subr.mxu0 0.0
    %1069 = vmatpush1.xpose.msra.mxu0 0.0
    %1070 = vmatprep.subr.mxu0 0.0
    %1071 = vmatpush1.xpose.msra.mxu0 0.0
    %1072 = vmatprep.subr.mxu0 0.0
    %1073 = vmatpush1.xpose.msra.mxu0 0.0
    %1074 = vmatprep.subr.mxu0 0.0
    %1075 = vmatpush1.xpose.msra.mxu0 0.0
    %1076 = vmatprep.subr.mxu0 0.0
    %1077 = vmatpush1.xpose.msra.mxu0 0.0
    %1078 = vmatprep.subr.mxu0 0.0
    %1079 = vmatpush1.xpose.msra.mxu0 0.0
    %1080 = vmatprep.subr.mxu0 0.0
    %1081 = vmatpush1.xpose.msra.mxu0 0.0
    %1082 = vmatprep.subr.mxu0 0.0
    %1083 = vmatpush1.xpose.msra.mxu0 0.0
    %1084 = vmatprep.mubr.f32.mxu0 0.0
    %1085 = vmatmul.mubr.f32.gmra.mrb[0].mxu0 %v1016
    %v1086 = vpop.f32.mrb[0].mxu0
    %v1087 = vadd.f32 0.0, %v1086
    %v1088 = vpop.f32.mrb[0].mxu0
    %1089 = vdwg.mxu0
    %v1090 = vmul.f32 %v1009, 0.17677669
    %v1091 = vmul.f32 %v1087, 0.17677669
    %v1092 = vsel %vm369, %v1090, -inf
    %1093 = vmax.xlane.f32.xlu0 %v1092
    %v1094 = vpop.xlane.xlu0 %1093
    %v1095 = vsel %vm369, %v1091, -inf
    %1096 = vmax.xlane.f32.xlu0 %v1095
    %v1097 = vpop.xlane.xlu0 %1096
    %v1098 = vsub.f32 %v1090, %v1094
    %v1099 = vsub.f32 %v1091, %v1097
    %v1100 = vmul.f32 %v1098, 1.442695
    %v1101 = vpow.pop %v1100
    %v1102 = vmul.f32 %v1099, 1.442695
    %v1103 = vpow.pop %v1102
    %v1104 = vsel %vm369, %v1101, 0.0
    %1105 = vadd.xlane.f32.xlu0 %v1104
    %v1106 = vpop.xlane.xlu0 %1105
    %v1107 = vsel %vm369, %v1103, 0.0
    %1108 = vadd.xlane.f32.xlu0 %v1107
    %v1109 = vpop.xlane.xlu0 %1108
    %v1110 = vrcp.pop %v1106
    %v1111 = vrcp.pop %v1109
    %v1112 = vmul.f32 %v1101, %v1110
    %v1113 = vmul.f32 %v1103, %v1111
    %1115 = vrot.lane.b32.xlu0 %v932, 64
    %v1116 = vpop.permute.xlu0 %1115
    %v1119 = vsel %vm369, %v1112, 0
    %1121 = vmatprep.subr.mxu0 0.0
    %1122 = vmatpush1.msra.mxu0 %v1116
    %1123 = vmatprep.subr.mxu0 0.0
    %1124 = vmatpush1.msra.mxu0 0.0
    %1125 = vmatprep.subr.mxu0 0.0
    %1126 = vmatpush1.msra.mxu0 0.0
    %1127 = vmatprep.subr.mxu0 0.0
    %1128 = vmatpush1.msra.mxu0 0.0
    %1129 = vmatprep.subr.mxu0 0.0
    %1130 = vmatpush1.msra.mxu0 0.0
    %1131 = vmatprep.subr.mxu0 0.0
    %1132 = vmatpush1.msra.mxu0 0.0
    %1133 = vmatprep.subr.mxu0 0.0
    %1134 = vmatpush1.msra.mxu0 0.0
    %1135 = vmatprep.subr.mxu0 0.0
    %1136 = vmatpush1.msra.mxu0 0.0
    %1137 = vmatprep.subr.mxu0 0.0
    %1138 = vmatpush1.msra.mxu0 0.0
    %1139 = vmatprep.subr.mxu0 0.0
    %1140 = vmatpush1.msra.mxu0 0.0
    %1141 = vmatprep.subr.mxu0 0.0
    %1142 = vmatpush1.msra.mxu0 0.0
    %1143 = vmatprep.subr.mxu0 0.0
    %1144 = vmatpush1.msra.mxu0 0.0
    %1145 = vmatprep.subr.mxu0 0.0
    %1146 = vmatpush1.msra.mxu0 0.0
    %1147 = vmatprep.subr.mxu0 0.0
    %1148 = vmatpush1.msra.mxu0 0.0
    %1149 = vmatprep.subr.mxu0 0.0
    %1150 = vmatpush1.msra.mxu0 0.0
    %1151 = vmatprep.subr.mxu0 0.0
    %1152 = vmatpush1.msra.mxu0 0.0
    %1153 = vmatprep.subr.mxu0 0.0
    %1154 = vmatpush1.msra.mxu0 0.0
    %1155 = vmatprep.subr.mxu0 0.0
    %1156 = vmatpush1.msra.mxu0 0.0
    %1157 = vmatprep.subr.mxu0 0.0
    %1158 = vmatpush1.msra.mxu0 0.0
    %1159 = vmatprep.subr.mxu0 0.0
    %1160 = vmatpush1.msra.mxu0 0.0
    %1161 = vmatprep.subr.mxu0 0.0
    %1162 = vmatpush1.msra.mxu0 0.0
    %1163 = vmatprep.subr.mxu0 0.0
    %1164 = vmatpush1.msra.mxu0 0.0
    %1165 = vmatprep.subr.mxu0 0.0
    %1166 = vmatpush1.msra.mxu0 0.0
    %1167 = vmatprep.subr.mxu0 0.0
    %1168 = vmatpush1.msra.mxu0 0.0
    %1169 = vmatprep.subr.mxu0 0.0
    %1170 = vmatpush1.msra.mxu0 0.0
    %1171 = vmatprep.subr.mxu0 0.0
    %1172 = vmatpush1.msra.mxu0 0.0
    %1173 = vmatprep.subr.mxu0 0.0
    %1174 = vmatpush1.msra.mxu0 0.0
    %1175 = vmatprep.subr.mxu0 0.0
    %1176 = vmatpush1.msra.mxu0 0.0
    %1177 = vmatprep.subr.mxu0 0.0
    %1178 = vmatpush1.msra.mxu0 0.0
    %1179 = vmatprep.subr.mxu0 0.0
    %1180 = vmatpush1.msra.mxu0 0.0
    %1181 = vmatprep.subr.mxu0 0.0
    %1182 = vmatpush1.msra.mxu0 0.0
    %1183 = vmatprep.subr.mxu0 0.0
    %1184 = vmatpush1.msra.mxu0 0.0
    %1185 = vmatprep.mubr.f32.mxu0 0.0
    %1186 = vmatmul.mubr.f32.gmra.mrb[0].mxu0 %v1119
    %v1187 = vpop.f32.mrb[0].mxu0
    %v1188 = vadd.f32 0.0, %v1187
    %v1189 = vpop.f32.mrb[0].mxu0
    %1190 = vdwg.mxu0
    %1192 = vrot.lane.b32.xlu0 %v933, 64
    %v1193 = vpop.permute.xlu0 %1192
    %v1196 = vsel %vm369, %v1113, 0
    %1198 = vmatprep.subr.mxu0 0.0
    %1199 = vmatpush1.msra.mxu0 %v1193
    %1200 = vmatprep.subr.mxu0 0.0
    %1201 = vmatpush1.msra.mxu0 0.0
    %1202 = vmatprep.subr.mxu0 0.0
    %1203 = vmatpush1.msra.mxu0 0.0
    %1204 = vmatprep.subr.mxu0 0.0
    %1205 = vmatpush1.msra.mxu0 0.0
    %1206 = vmatprep.subr.mxu0 0.0
    %1207 = vmatpush1.msra.mxu0 0.0
    %1208 = vmatprep.subr.mxu0 0.0
    %1209 = vmatpush1.msra.mxu0 0.0
    %1210 = vmatprep.subr.mxu0 0.0
    %1211 = vmatpush1.msra.mxu0 0.0
    %1212 = vmatprep.subr.mxu0 0.0
    %1213 = vmatpush1.msra.mxu0 0.0
    %1214 = vmatprep.subr.mxu0 0.0
    %1215 = vmatpush1.msra.mxu0 0.0
    %1216 = vmatprep.subr.mxu0 0.0
    %1217 = vmatpush1.msra.mxu0 0.0
    %1218 = vmatprep.subr.mxu0 0.0
    %1219 = vmatpush1.msra.mxu0 0.0
    %1220 = vmatprep.subr.mxu0 0.0
    %1221 = vmatpush1.msra.mxu0 0.0
    %1222 = vmatprep.subr.mxu0 0.0
    %1223 = vmatpush1.msra.mxu0 0.0
    %1224 = vmatprep.subr.mxu0 0.0
    %1225 = vmatpush1.msra.mxu0 0.0
    %1226 = vmatprep.subr.mxu0 0.0
    %1227 = vmatpush1.msra.mxu0 0.0
    %1228 = vmatprep.subr.mxu0 0.0
    %1229 = vmatpush1.msra.mxu0 0.0
    %1230 = vmatprep.subr.mxu0 0.0
    %1231 = vmatpush1.msra.mxu0 0.0
    %1232 = vmatprep.subr.mxu0 0.0
    %1233 = vmatpush1.msra.mxu0 0.0
    %1234 = vmatprep.subr.mxu0 0.0
    %1235 = vmatpush1.msra.mxu0 0.0
    %1236 = vmatprep.subr.mxu0 0.0
    %1237 = vmatpush1.msra.mxu0 0.0
    %1238 = vmatprep.subr.mxu0 0.0
    %1239 = vmatpush1.msra.mxu0 0.0
    %1240 = vmatprep.subr.mxu0 0.0
    %1241 = vmatpush1.msra.mxu0 0.0
    %1242 = vmatprep.subr.mxu0 0.0
    %1243 = vmatpush1.msra.mxu0 0.0
    %1244 = vmatprep.subr.mxu0 0.0
    %1245 = vmatpush1.msra.mxu0 0.0
    %1246 = vmatprep.subr.mxu0 0.0
    %1247 = vmatpush1.msra.mxu0 0.0
    %1248 = vmatprep.subr.mxu0 0.0
    %1249 = vmatpush1.msra.mxu0 0.0
    %1250 = vmatprep.subr.mxu0 0.0
    %1251 = vmatpush1.msra.mxu0 0.0
    %1252 = vmatprep.subr.mxu0 0.0
    %1253 = vmatpush1.msra.mxu0 0.0
    %1254 = vmatprep.subr.mxu0 0.0
    %1255 = vmatpush1.msra.mxu0 0.0
    %1256 = vmatprep.subr.mxu0 0.0
    %1257 = vmatpush1.msra.mxu0 0.0
    %1258 = vmatprep.subr.mxu0 0.0
    %1259 = vmatpush1.msra.mxu0 0.0
    %1260 = vmatprep.subr.mxu0 0.0
    %1261 = vmatpush1.msra.mxu0 0.0
    %1262 = vmatprep.mubr.f32.mxu0 0.0
    %1263 = vmatmul.mubr.f32.gmra.mrb[0].mxu0 %v1196
    %v1264 = vpop.f32.mrb[0].mxu0
    %v1265 = vadd.f32 0.0, %v1264
    %v1266 = vpop.f32.mrb[0].mxu0
    %1267 = vdwg.mxu0
    %v1268 = vadd.f32 %v794, %v1188
    %v1269 = vadd.f32 %v795, %v1265
    %v1270 = vsel %vm34, %v1268, 0.0
    %1271 = vadd.xlane.f32.xlu0 %v1270
    %v1272 = vpop.xlane.xlu0 %1271
    %v1273 = vsel %vm34, %v1269, 0.0
    %1274 = vadd.xlane.f32.xlu0 %v1273
    %v1275 = vpop.xlane.xlu0 %1274
    %v1276 = vmul.f32 %v1272, %v41
    %v1277 = vmul.f32 %v1275, %v41
    %v1278 = vsub.f32 %v1268, %v1276
    %v1279 = vsub.f32 %v1269, %v1277
    %v1280 = vmul.f32 %v1278, %v1278
    %v1281 = vmul.f32 %v1279, %v1279
    %v1282 = vsel %vm34, %v1280, 0.0
    %1283 = vadd.xlane.f32.xlu0 %v1282
    %v1284 = vpop.xlane.xlu0 %1283
    %v1285 = vsel %vm34, %v1281, 0.0
    %1286 = vadd.xlane.f32.xlu0 %v1285
    %v1287 = vpop.xlane.xlu0 %1286
    %v1288 = vmul.f32 %v1284, %v41
    %v1289 = vmul.f32 %v1287, %v41
    %v1290 = vadd.f32 %v1288, 1e-05
    %v1291 = vadd.f32 %v1289, 1e-05
    %v1292 = vrsqrt.pop %v1290
    %v1293 = vrsqrt.pop %v1291
    %v1294 = vmul.f32 %v1278, %v1292
    %v1295 = vmul.f32 %v1279, %v1293
    %v1296 = vlaneseq
    %v1297 = vshrl.u32 %v1296, 7
    %v1298 = vsub.s32 3, %v1297
    %v1299 = vrot.slane %v802, %v1298
    %v1300 = vmul.f32 %v1294, %v1299
    %v1301 = vmul.f32 %v1295, %v1299
    %v1302 = vlaneseq
    %v1303 = vshrl.u32 %v1302, 7
    %v1304 = vsub.s32 4, %v1303
    %v1305 = vrot.slane %v802, %v1304
    %v1306 = vadd.f32 %v1300, %v1305
    %v1307 = vadd.f32 %v1301, %v1305
    %v1309 = vlaneseq
    %v1310 = vshrl.u32 %v1309, 7
    %v1311 = vsub.s32 0, %v1310
    %v1312 = vrot.slane %v809, %v1311
    %v1315 = vsel %vm34, %v1306, 0
    %v1318 = vsel %vm34, %v1307, 0
    %1320 = vmatprep.subr.mxu0 0.0
    %1321 = vmatpush1.msra.mxu0 %v804
    %1322 = vmatprep.subr.mxu0 0.0
    %1323 = vmatpush1.msra.mxu0 %v805
    %1324 = vmatprep.subr.mxu0 0.0
    %1325 = vmatpush1.msra.mxu0 %v806
    %1326 = vmatprep.subr.mxu0 0.0
    %1327 = vmatpush1.msra.mxu0 %v807
    %1328 = vmatprep.subr.mxu0 0.0
    %1329 = vmatpush1.msra.mxu0 0.0
    %1330 = vmatprep.subr.mxu0 0.0
    %1331 = vmatpush1.msra.mxu0 0.0
    %1332 = vmatprep.subr.mxu0 0.0
    %1333 = vmatpush1.msra.mxu0 0.0
    %1334 = vmatprep.subr.mxu0 0.0
    %1335 = vmatpush1.msra.mxu0 0.0
    %1336 = vmatprep.subr.mxu0 0.0
    %1337 = vmatpush1.msra.mxu0 0.0
    %1338 = vmatprep.subr.mxu0 0.0
    %1339 = vmatpush1.msra.mxu0 0.0
    %1340 = vmatprep.subr.mxu0 0.0
    %1341 = vmatpush1.msra.mxu0 0.0
    %1342 = vmatprep.subr.mxu0 0.0
    %1343 = vmatpush1.msra.mxu0 0.0
    %1344 = vmatprep.subr.mxu0 0.0
    %1345 = vmatpush1.msra.mxu0 0.0
    %1346 = vmatprep.subr.mxu0 0.0
    %1347 = vmatpush1.msra.mxu0 0.0
    %1348 = vmatprep.subr.mxu0 0.0
    %1349 = vmatpush1.msra.mxu0 0.0
    %1350 = vmatprep.subr.mxu0 0.0
    %1351 = vmatpush1.msra.mxu0 0.0
    %1352 = vmatprep.subr.mxu0 0.0
    %1353 = vmatpush1.msra.mxu0 0.0
    %1354 = vmatprep.subr.mxu0 0.0
    %1355 = vmatpush1.msra.mxu0 0.0
    %1356 = vmatprep.subr.mxu0 0.0
    %1357 = vmatpush1.msra.mxu0 0.0
    %1358 = vmatprep.subr.mxu0 0.0
    %1359 = vmatpush1.msra.mxu0 0.0
    %1360 = vmatprep.subr.mxu0 0.0
    %1361 = vmatpush1.msra.mxu0 0.0
    %1362 = vmatprep.subr.mxu0 0.0
    %1363 = vmatpush1.msra.mxu0 0.0
    %1364 = vmatprep.subr.mxu0 0.0
    %1365 = vmatpush1.msra.mxu0 0.0
    %1366 = vmatprep.subr.mxu0 0.0
    %1367 = vmatpush1.msra.mxu0 0.0
    %1368 = vmatprep.subr.mxu0 0.0
    %1369 = vmatpush1.msra.mxu0 0.0
    %1370 = vmatprep.subr.mxu0 0.0
    %1371 = vmatpush1.msra.mxu0 0.0
    %1372 = vmatprep.subr.mxu0 0.0
    %1373 = vmatpush1.msra.mxu0 0.0
    %1374 = vmatprep.subr.mxu0 0.0
    %1375 = vmatpush1.msra.mxu0 0.0
    %1376 = vmatprep.subr.mxu0 0.0
    %1377 = vmatpush1.msra.mxu0 0.0
    %1378 = vmatprep.subr.mxu0 0.0
    %1379 = vmatpush1.msra.mxu0 0.0
    %1380 = vmatprep.subr.mxu0 0.0
    %1381 = vmatpush1.msra.mxu0 0.0
    %1382 = vmatprep.subr.mxu0 0.0
    %1383 = vmatpush1.msra.mxu0 0.0
    %1384 = vmatprep.mubr.f32.mxu0 0.0
    %1385 = vmatmul.mubr.f32.gmra.mrb[0].mxu0 %v1315
    %v1386 = vpop.f32.mrb[0].mxu0
    %v1387 = vadd.f32 %v1312, %v1386
    %v1388 = vpop.f32.mrb[0].mxu0
    %1389 = vmatprep.mubr.f32.mxu0 0.0
    %1390 = vmatmul.mubr.f32.gmra.mrb[0].mxu0 %v1318
    %v1391 = vpop.f32.mrb[0].mxu0
    %v1392 = vadd.f32 %v1312, %v1391
    %v1393 = vpop.f32.mrb[0].mxu0
    %1394 = vdwg.mxu0
    %v1395 = vmax.f32 %v1387, 0.0
    %v1396 = vmax.f32 %v1392, 0.0
    %v1397 = vlaneseq
    %v1398 = vshrl.u32 %v1397, 7
    %v1399 = vsub.s32 5, %v1398
    %v1400 = vrot.slane %v802, %v1399
    %1401 = vmatprep.subr.mxu0 0.0
    %1402 = vmatpush1.msra.mxu0 %v811
    %1403 = vmatprep.subr.mxu0 0.0
    %1404 = vmatpush1.msra.mxu0 %v812
    %1405 = vmatprep.subr.mxu0 0.0
    %1406 = vmatpush1.msra.mxu0 %v813
    %1407 = vmatprep.subr.mxu0 0.0
    %1408 = vmatpush1.msra.mxu0 %v814
    %1409 = vmatprep.subr.mxu0 0.0
    %1410 = vmatpush1.msra.mxu0 %v815
    %1411 = vmatprep.subr.mxu0 0.0
    %1412 = vmatpush1.msra.mxu0 %v816
    %1413 = vmatprep.subr.mxu0 0.0
    %1414 = vmatpush1.msra.mxu0 %v817
    %1415 = vmatprep.subr.mxu0 0.0
    %1416 = vmatpush1.msra.mxu0 %v818
    %1417 = vmatprep.subr.mxu0 0.0
    %1418 = vmatpush1.msra.mxu0 %v819
    %1419 = vmatprep.subr.mxu0 0.0
    %1420 = vmatpush1.msra.mxu0 %v820
    %1421 = vmatprep.subr.mxu0 0.0
    %1422 = vmatpush1.msra.mxu0 %v821
    %1423 = vmatprep.subr.mxu0 0.0
    %1424 = vmatpush1.msra.mxu0 %v822
    %1425 = vmatprep.subr.mxu0 0.0
    %1426 = vmatpush1.msra.mxu0 %v823
    %1427 = vmatprep.subr.mxu0 0.0
    %1428 = vmatpush1.msra.mxu0 %v824
    %1429 = vmatprep.subr.mxu0 0.0
    %1430 = vmatpush1.msra.mxu0 %v825
    %1431 = vmatprep.subr.mxu0 0.0
    %1432 = vmatpush1.msra.mxu0 %v826
    %1433 = vmatprep.subr.mxu0 0.0
    %1434 = vmatpush1.msra.mxu0 0.0
    %1435 = vmatprep.subr.mxu0 0.0
    %1436 = vmatpush1.msra.mxu0 0.0
    %1437 = vmatprep.subr.mxu0 0.0
    %1438 = vmatpush1.msra.mxu0 0.0
    %1439 = vmatprep.subr.mxu0 0.0
    %1440 = vmatpush1.msra.mxu0 0.0
    %1441 = vmatprep.subr.mxu0 0.0
    %1442 = vmatpush1.msra.mxu0 0.0
    %1443 = vmatprep.subr.mxu0 0.0
    %1444 = vmatpush1.msra.mxu0 0.0
    %1445 = vmatprep.subr.mxu0 0.0
    %1446 = vmatpush1.msra.mxu0 0.0
    %1447 = vmatprep.subr.mxu0 0.0
    %1448 = vmatpush1.msra.mxu0 0.0
    %1449 = vmatprep.subr.mxu0 0.0
    %1450 = vmatpush1.msra.mxu0 0.0
    %1451 = vmatprep.subr.mxu0 0.0
    %1452 = vmatpush1.msra.mxu0 0.0
    %1453 = vmatprep.subr.mxu0 0.0
    %1454 = vmatpush1.msra.mxu0 0.0
    %1455 = vmatprep.subr.mxu0 0.0
    %1456 = vmatpush1.msra.mxu0 0.0
    %1457 = vmatprep.subr.mxu0 0.0
    %1458 = vmatpush1.msra.mxu0 0.0
    %1459 = vmatprep.subr.mxu0 0.0
    %1460 = vmatpush1.msra.mxu0 0.0
    %1461 = vmatprep.subr.mxu0 0.0
    %1462 = vmatpush1.msra.mxu0 0.0
    %1463 = vmatprep.subr.mxu0 0.0
    %1464 = vmatpush1.msra.mxu0 0.0
    %1465 = vmatprep.mubr.f32.mxu0 0.0
    %1466 = vmatmul.mubr.f32.gmra.mrb[0].mxu0 %v1395
    %v1467 = vpop.f32.mrb[0].mxu0
    %v1468 = vadd.f32 %v1400, %v1467
    %v1469 = vpop.f32.mrb[0].mxu0
    %1470 = vmatprep.mubr.f32.mxu0 0.0
    %1471 = vmatmul.mubr.f32.gmra.mrb[0].mxu0 %v1396
    %v1472 = vpop.f32.mrb[0].mxu0
    %v1473 = vadd.f32 %v1400, %v1472
    %v1474 = vpop.f32.mrb[0].mxu0
    %1475 = vdwg.mxu0
    %v1476 = vadd.f32 %v1306, %v1468
    %v1477 = vadd.f32 %v1307, %v1473
    %v1478 = vsel %vm34, %v1476, 0.0
    %1479 = vadd.xlane.f32.xlu0 %v1478
    %v1480 = vpop.xlane.xlu0 %1479
    %v1481 = vsel %vm34, %v1477, 0.0
    %1482 = vadd.xlane.f32.xlu0 %v1481
    %v1483 = vpop.xlane.xlu0 %1482
    %v1484 = vmul.f32 %v1480, %v41
    %v1485 = vmul.f32 %v1483, %v41
    %v1486 = vsub.f32 %v1476, %v1484
    %v1487 = vsub.f32 %v1477, %v1485
    %v1488 = vmul.f32 %v1486, %v1486
    %v1489 = vmul.f32 %v1487, %v1487
    %v1490 = vsel %vm34, %v1488, 0.0
    %1491 = vadd.xlane.f32.xlu0 %v1490
    %v1492 = vpop.xlane.xlu0 %1491
    %v1493 = vsel %vm34, %v1489, 0.0
    %1494 = vadd.xlane.f32.xlu0 %v1493
    %v1495 = vpop.xlane.xlu0 %1494
    %v1496 = vmul.f32 %v1492, %v41
    %v1497 = vmul.f32 %v1495, %v41
    %v1498 = vadd.f32 %v1496, 1e-05
    %v1499 = vadd.f32 %v1497, 1e-05
    %v1500 = vrsqrt.pop %v1498
    %v1501 = vrsqrt.pop %v1499
    %v1502 = vmul.f32 %v1486, %v1500
    %v1503 = vmul.f32 %v1487, %v1501
    %v1504 = vlaneseq
    %v1505 = vshrl.u32 %v1504, 7
    %v1506 = vsub.s32 6, %v1505
    %v1507 = vrot.slane %v802, %v1506
    %v1508 = vmul.f32 %v1502, %v1507
    %v1509 = vmul.f32 %v1503, %v1507
    %v1510 = vlaneseq
    %v1511 = vshrl.u32 %v1510, 7
    %v1512 = vsub.s32 7, %v1511
    %v1513 = vrot.slane %v802, %v1512
    %v1514 = vadd.f32 %v1508, %v1513
    %v1515 = vadd.f32 %v1509, %v1513
    %v1516 = vadd.f32 %v794, %v1514
    %v1517 = vadd.f32 %v795, %v1515
    %1518 = vst.msk [vmem:[#allocation2] sm:$0xff] %vm34, %v1516
    %1519 = vst.msk [vmem:[#allocation2 + $0x8] sm:$0xff] %vm34, %v1517
    // Predicated region
    $region34: #{tpu_custom_call.1} parent=1 // pred_check
      _
    $region35: #{tpu_custom_call.1} parent=1 // pred_check_branch
      %1521 = sbr.rel (0) target = $region37
    $region36: #{tpu_custom_call.1} parent=1 // pred_region
      %s1523 = ssub.s32 256, 256
      %1524 = vsyncadd [#allocation3], %s1523
      %s1525 = sshll.u32 [#allocation2], 4
      %s1526 = int_to_ptr.vmem [resolvable:$true] %s1525
      %1531 = dma.vmem_to_hbm [thread:$0]  %s1526, 256, %s8, [#allocation3], 128, 128, 8
    $region37: #{tpu_custom_call.1} parent=1 // pred_fallthru
      _
    // Predicated region
    $region38: #{tpu_custom_call.1} parent=1 // pred_check
      _
    $region39: #{tpu_custom_call.1} parent=1 // pred_check_branch
      %1533 = sbr.rel (0) target = $region41
    $region40: #{tpu_custom_call.1} parent=1 // pred_region
      %1534 = dma.done [#allocation3], 256
    $region41: #{tpu_custom_call.1} parent=1 // pred_fallthru
      _
    %1535 = vsyncpa [#allocation3], 1

</llo_original>
